<compile_context>
chip_gen: v7x
topology: tpu7x:2x2x1
jax: 0.10.0
libtpu: 0.0.40
codegen_flags: <defaults>
</compile_context>

<pallas_src>
import functools

import jax
import jax.numpy as jnp
from jax import lax
from jax.experimental import pallas as pl
from jax.experimental.pallas import tpu as pltpu

EPS = 1e-5
CP = 8   # channel count padded up to one full sublane tile


def basic_block_kernel(x_ref, w1_ref, w2_ref, gb_ref, mask_ref, o_ref,
                       patch_ref, *, M, taps, tap_rows):
    """conv3x3 -> BN -> relu -> conv3x3 -> BN -> add(identity) -> relu.

    x_ref     : (CP, M)      activations, M = N*H*W flattened onto lanes
    w*_ref    : (CP, 9*CP)   conv weights, tap-major / in-channel-minor columns
    gb_ref    : (CP, 4)      packed BN params, columns [g1, b1, g2, b2]
    mask_ref  : (8, M)       non-centre tap validity masks (zero-padding logic)
    o_ref     : (CP, M)      output (lane-dense slab)
    patch_ref : (9*CP, M)    im2col scratch -> ONE MXU matmul per conv
    """
    x = x_ref[...]                                        # (CP, M)

    def conv3x3(w_ref, src):
        # im2col: each tap is a circular lane roll of the activation, masked so
        # every wrap-around / cross-image lane contributes zero, written as one
        # aligned 8-row store.  pltpu.roll(v, k, 1)[:, m] == v[:, (m - k) % M],
        # so shift k = (-s) % M yields the tap value src[:, m + s].
        for t, s in enumerate(taps):
            v = src if s == 0 else pltpu.roll(src, (-s) % M, axis=1)
            r = tap_rows[t]
            if r >= 0:                       # centre tap: mask is all-ones
                v = v * mask_ref[r:r + 1, :]
            patch_ref[t * CP:(t + 1) * CP, :] = v
        # (CP, 9*CP) @ (9*CP, M) -> (CP, M) with f32 accumulation on the MXU.
        return jnp.dot(w_ref[...], patch_ref[...],
                       preferred_element_type=jnp.float32)

    def bn_fold(y, gcol, bcol):
        # Training-mode batch statistics folded into per-channel scale / bias.
        inv_m = 1.0 / M
        mean = jnp.sum(y, axis=1, keepdims=True) * inv_m             # (CP, 1)
        var = jnp.sum(y * y, axis=1, keepdims=True) * inv_m - mean * mean
        var = jnp.maximum(var, 0.0)          # guard single-pass cancellation
        scale = gb_ref[:, gcol:gcol + 1] * lax.rsqrt(var + EPS)
        bias = gb_ref[:, bcol:bcol + 1] - mean * scale
        return scale, bias

    # ---- conv1 -> bn1 -> relu ----------------------------------------------
    y1 = conv3x3(w1_ref, x)
    s1, b1 = bn_fold(y1, 0, 1)
    h1 = jnp.maximum(y1 * s1 + b1, 0.0)

    # ---- conv2 -> bn2 -> identity shortcut -> relu --------------------------
    y2 = conv3x3(w2_ref, h1)
    s2, b2 = bn_fold(y2, 2, 3)
    o_ref[...] = jnp.maximum(y2 * s2 + b2 + x, 0.0)


def basic_block(x_nchw, w1_oihw, g1, b1, w2_oihw, g2, b2):
    """Wrapper: takes PyTorch-convention NCHW input / OIHW weights."""
    N, C, H, W = x_nchw.shape
    assert C <= CP, "identity-shortcut toy config assumes C <= 8"
    M = N * H * W

    # ---- layout glue (plain XLA, outside the kernel) ------------------------
    # channels -> sublanes (zero-padded to CP=8), flattened pixels -> lanes.
    x_cm = jnp.transpose(x_nchw, (1, 0, 2, 3)).reshape(C, M).astype(jnp.float32)
    x_cm = jnp.pad(x_cm, ((0, CP - C), (0, 0)))

    def prep_w(w):
        # OIHW -> pad O/I to CP -> (O, ky, kx, I) -> (CP, 9*CP): column
        # (ky*3+kx)*CP + i multiplies im2col row tap*CP + i.
        w = jnp.pad(w.astype(jnp.float32),
                    ((0, CP - C), (0, CP - C), (0, 0), (0, 0)))
        return jnp.transpose(w, (0, 2, 3, 1)).reshape(CP, 9 * CP)

    w1r, w2r = prep_w(w1_oihw), prep_w(w2_oihw)

    def prep_p(v, fill):
        return jnp.concatenate(
            [v.astype(jnp.float32), jnp.full((CP - C,), fill, jnp.float32)])

    # BN gamma/beta packed into a single (CP, 4) array: [g1, b1, g2, b2].
    gb = jnp.stack([prep_p(g1, 1.0), prep_p(b1, 0.0),
                    prep_p(g2, 1.0), prep_p(b2, 0.0)], axis=1)

    # Per-tap validity masks: implement the conv's zero padding and keep taps
    # from leaking across row / image boundaries in the flattened layout.
    # The centre tap is all ones and is skipped in-kernel.
    pos = jnp.arange(M, dtype=jnp.int32) % (H * W)
    yy, xx = pos // W, pos % W
    taps, tap_rows, rows = [], [], []
    for dy in (-1, 0, 1):
        for dx in (-1, 0, 1):
            taps.append(dy * W + dx)
            if dy == 0 and dx == 0:
                tap_rows.append(-1)
                continue
            tap_rows.append(len(rows))
            valid = ((yy + dy >= 0) & (yy + dy < H) &
                     (xx + dx >= 0) & (xx + dx < W))
            rows.append(valid.astype(jnp.float32))
    masks = jnp.stack(rows, axis=0)                       # (8, M)

    kernel = functools.partial(basic_block_kernel, M=M, taps=tuple(taps),
                               tap_rows=tuple(tap_rows))
    idx = lambda i: (0, 0)

    out_cm = pl.pallas_call(
        kernel,
        out_shape=jax.ShapeDtypeStruct((CP, M), jnp.float32),
        # Training-mode BN needs global batch statistics, and the whole block
        # (~0.3 MB incl. scratch) fits in VMEM, so one fused step; no
        # intermediate ever round-trips through HBM.
        grid=(1,),
        in_specs=[
            pl.BlockSpec((CP, M), idx),          # activations (chan x pixels)
            pl.BlockSpec((CP, 9 * CP), idx),     # conv1 weight (im2col layout)
            pl.BlockSpec((CP, 9 * CP), idx),     # conv2 weight
            pl.BlockSpec((CP, 4), idx),          # packed BN gamma/beta
            pl.BlockSpec((8, M), idx),           # non-centre tap masks
        ],
        out_specs=pl.BlockSpec((CP, M), idx),    # lane-dense output slab
        scratch_shapes=[
            pltpu.VMEM((9 * CP, M), jnp.float32),   # im2col staging buffer
        ],
        compiler_params=pltpu.CompilerParams(
            dimension_semantics=("arbitrary",)),
    )(x_cm, w1r, w2r, gb, masks)

    return jnp.transpose(out_cm[:C].reshape(C, N, H, W), (1, 0, 2, 3))  # NCHW


def reference(x_nchw, w1, g1, b1, w2, g2, b2):
    """Pure-JAX reference mirroring the PyTorch forward (training-mode BN)."""
    def conv(x, w):
        return jax.lax.conv_general_dilated(
            x, w, window_strides=(1, 1), padding=((1, 1), (1, 1)),
            dimension_numbers=("NCHW", "OIHW", "NCHW"))

    def bn(x, g, b):
        mean = jnp.mean(x, axis=(0, 2, 3), keepdims=True)
        var = jnp.mean((x - mean) ** 2, axis=(0, 2, 3), keepdims=True)
        return ((x - mean) * jax.lax.rsqrt(var + EPS)
                * g.reshape(1, -1, 1, 1) + b.reshape(1, -1, 1, 1))

    out = jax.nn.relu(bn(conv(x_nchw, w1), g1, b1))
    out = bn(conv(out, w2), g2, b2)
    out = out + x_nchw                                    # identity shortcut
    return jax.nn.relu(out)


if __name__ == "__main__":
    key = jax.random.PRNGKey(0)
    k_x, k_w1, k_w2 = jax.random.split(key, 3)

    # BasicBlock(in_planes=4, planes=4, stride=1) on a (2, 4, 16, 16) input.
    N, C, H, W = 2, 4, 16, 16
    x = jax.random.normal(k_x, (N, C, H, W), jnp.float32)
    w1 = jax.random.normal(k_w1, (C, C, 3, 3), jnp.float32) * 0.1   # conv1 OIHW
    w2 = jax.random.normal(k_w2, (C, C, 3, 3), jnp.float32) * 0.1   # conv2 OIHW
    # BatchNorm2d default init: weight = 1, bias = 0.
    g1 = jnp.ones((C,), jnp.float32)
    b1 = jnp.zeros((C,), jnp.float32)
    g2 = jnp.ones((C,), jnp.float32)
    b2 = jnp.zeros((C,), jnp.float32)

    out = basic_block(x, w1, g1, b1, w2, g2, b2)
    jax.block_until_ready(out)

    ref = reference(x, w1, g1, b1, w2, g2, b2)
    assert out.shape == (N, C, H, W), out.shape
    err = float(jnp.max(jnp.abs(out - ref)))
    assert jnp.allclose(out, ref, atol=2e-4, rtol=2e-4), f"max abs err = {err}"

    print("KERNEL_OK")
</pallas_src>

<mosaic_0001>
module attributes {stable_mosaic.version = 11 : i64} {
  func.func @basic_block_kernel(%arg0: i32, %arg1: memref<8x512xf32, #tpu.memory_space<vmem>>, %arg2: memref<8x72xf32, #tpu.memory_space<vmem>>, %arg3: memref<8x72xf32, #tpu.memory_space<vmem>>, %arg4: memref<8x4xf32, #tpu.memory_space<vmem>>, %arg5: memref<8x512xf32, #tpu.memory_space<vmem>>, %arg6: memref<8x512xf32, #tpu.memory_space<vmem>>, %arg7: memref<72x512xf32, #tpu.memory_space<vmem>>) attributes {dimension_semantics = [#tpu.dimension_semantics<arbitrary>], iteration_bounds = array<i64: 1>, scalar_prefetch = 0 : i64, scratch_operands = 1 : i64, tpu.core_type = #tpu.core_type<tc>, window_params = [{pipeline_mode = #tpu.pipeline_mode<synchronous>, transform_indices = @transform_0, window_bounds = array<i64: 8, 512>}, {pipeline_mode = #tpu.pipeline_mode<synchronous>, transform_indices = @transform_1, window_bounds = array<i64: 8, 72>}, {pipeline_mode = #tpu.pipeline_mode<synchronous>, transform_indices = @transform_2, window_bounds = array<i64: 8, 72>}, {pipeline_mode = #tpu.pipeline_mode<synchronous>, transform_indices = @transform_3, window_bounds = array<i64: 8, 4>}, {pipeline_mode = #tpu.pipeline_mode<synchronous>, transform_indices = @transform_4, window_bounds = array<i64: 8, 512>}, {pipeline_mode = #tpu.pipeline_mode<synchronous>, transform_indices = @transform_5, window_bounds = array<i64: 8, 512>}]} {
    %c0 = arith.constant 0 : index
    %c0_0 = arith.constant 0 : index
    %0 = vector.load %arg1[%c0, %c0_0] : memref<8x512xf32, #tpu.memory_space<vmem>>, vector<8x512xf32>
    %c17_i32 = arith.constant 17 : i32
    %1 = tpu.dynamic_rotate %0 by %c17_i32 dim 1 : vector<8x512xf32>, i32 -> vector<8x512xf32>
    %c0_1 = arith.constant 0 : index
    %c0_2 = arith.constant 0 : index
    %2 = vector.load %arg5[%c0_1, %c0_2] : memref<8x512xf32, #tpu.memory_space<vmem>>, vector<1x512xf32>
    %3 = vector.broadcast %2 : vector<1x512xf32> to vector<8x512xf32>
    %4 = arith.mulf %1, %3 : vector<8x512xf32>
    %c0_3 = arith.constant 0 : index
    %c0_4 = arith.constant 0 : index
    %5 = vector.load %arg7[%c0_3, %c0_4] : memref<72x512xf32, #tpu.memory_space<vmem>>, vector<8x512xf32>
    tpu.vector_store %arg7[%c0_3, %c0_4], %4 {strides = array<i32>} : memref<72x512xf32, #tpu.memory_space<vmem>>, vector<8x512xf32>,
    %c16_i32 = arith.constant 16 : i32
    %6 = tpu.dynamic_rotate %0 by %c16_i32 dim 1 : vector<8x512xf32>, i32 -> vector<8x512xf32>
    %c1 = arith.constant 1 : index
    %c0_5 = arith.constant 0 : index
    %7 = vector.load %arg5[%c1, %c0_5] : memref<8x512xf32, #tpu.memory_space<vmem>>, vector<1x512xf32>
    %8 = vector.broadcast %7 : vector<1x512xf32> to vector<8x512xf32>
    %9 = arith.mulf %6, %8 : vector<8x512xf32>
    %c8 = arith.constant 8 : index
    %c0_6 = arith.constant 0 : index
    %10 = vector.load %arg7[%c8, %c0_6] : memref<72x512xf32, #tpu.memory_space<vmem>>, vector<8x512xf32>
    tpu.vector_store %arg7[%c8, %c0_6], %9 {strides = array<i32>} : memref<72x512xf32, #tpu.memory_space<vmem>>, vector<8x512xf32>,
    %c15_i32 = arith.constant 15 : i32
    %11 = tpu.dynamic_rotate %0 by %c15_i32 dim 1 : vector<8x512xf32>, i32 -> vector<8x512xf32>
    %c2 = arith.constant 2 : index
    %c0_7 = arith.constant 0 : index
    %12 = vector.load %arg5[%c2, %c0_7] : memref<8x512xf32, #tpu.memory_space<vmem>>, vector<1x512xf32>
    %13 = vector.broadcast %12 : vector<1x512xf32> to vector<8x512xf32>
    %14 = arith.mulf %11, %13 : vector<8x512xf32>
    %c16 = arith.constant 16 : index
    %c0_8 = arith.constant 0 : index
    %15 = vector.load %arg7[%c16, %c0_8] : memref<72x512xf32, #tpu.memory_space<vmem>>, vector<8x512xf32>
    tpu.vector_store %arg7[%c16, %c0_8], %14 {strides = array<i32>} : memref<72x512xf32, #tpu.memory_space<vmem>>, vector<8x512xf32>,
    %c1_i32 = arith.constant 1 : i32
    %16 = tpu.dynamic_rotate %0 by %c1_i32 dim 1 : vector<8x512xf32>, i32 -> vector<8x512xf32>
    %c3 = arith.constant 3 : index
    %c0_9 = arith.constant 0 : index
    %17 = vector.load %arg5[%c3, %c0_9] : memref<8x512xf32, #tpu.memory_space<vmem>>, vector<1x512xf32>
    %18 = vector.broadcast %17 : vector<1x512xf32> to vector<8x512xf32>
    %19 = arith.mulf %16, %18 : vector<8x512xf32>
    %c24 = arith.constant 24 : index
    %c0_10 = arith.constant 0 : index
    %20 = vector.load %arg7[%c24, %c0_10] : memref<72x512xf32, #tpu.memory_space<vmem>>, vector<8x512xf32>
    tpu.vector_store %arg7[%c24, %c0_10], %19 {strides = array<i32>} : memref<72x512xf32, #tpu.memory_space<vmem>>, vector<8x512xf32>,
    %c32 = arith.constant 32 : index
    %c0_11 = arith.constant 0 : index
    %21 = vector.load %arg7[%c32, %c0_11] : memref<72x512xf32, #tpu.memory_space<vmem>>, vector<8x512xf32>
    tpu.vector_store %arg7[%c32, %c0_11], %0 {strides = array<i32>} : memref<72x512xf32, #tpu.memory_space<vmem>>, vector<8x512xf32>,
    %c511_i32 = arith.constant 511 : i32
    %22 = tpu.dynamic_rotate %0 by %c511_i32 dim 1 : vector<8x512xf32>, i32 -> vector<8x512xf32>
    %c4 = arith.constant 4 : index
    %c0_12 = arith.constant 0 : index
    %23 = vector.load %arg5[%c4, %c0_12] : memref<8x512xf32, #tpu.memory_space<vmem>>, vector<1x512xf32>
    %24 = vector.broadcast %23 : vector<1x512xf32> to vector<8x512xf32>
    %25 = arith.mulf %22, %24 : vector<8x512xf32>
    %c40 = arith.constant 40 : index
    %c0_13 = arith.constant 0 : index
    %26 = vector.load %arg7[%c40, %c0_13] : memref<72x512xf32, #tpu.memory_space<vmem>>, vector<8x512xf32>
    tpu.vector_store %arg7[%c40, %c0_13], %25 {strides = array<i32>} : memref<72x512xf32, #tpu.memory_space<vmem>>, vector<8x512xf32>,
    %c497_i32 = arith.constant 497 : i32
    %27 = tpu.dynamic_rotate %0 by %c497_i32 dim 1 : vector<8x512xf32>, i32 -> vector<8x512xf32>
    %c5 = arith.constant 5 : index
    %c0_14 = arith.constant 0 : index
    %28 = vector.load %arg5[%c5, %c0_14] : memref<8x512xf32, #tpu.memory_space<vmem>>, vector<1x512xf32>
    %29 = vector.broadcast %28 : vector<1x512xf32> to vector<8x512xf32>
    %30 = arith.mulf %27, %29 : vector<8x512xf32>
    %c48 = arith.constant 48 : index
    %c0_15 = arith.constant 0 : index
    %31 = vector.load %arg7[%c48, %c0_15] : memref<72x512xf32, #tpu.memory_space<vmem>>, vector<8x512xf32>
    tpu.vector_store %arg7[%c48, %c0_15], %30 {strides = array<i32>} : memref<72x512xf32, #tpu.memory_space<vmem>>, vector<8x512xf32>,
    %c496_i32 = arith.constant 496 : i32
    %32 = tpu.dynamic_rotate %0 by %c496_i32 dim 1 : vector<8x512xf32>, i32 -> vector<8x512xf32>
    %c6 = arith.constant 6 : index
    %c0_16 = arith.constant 0 : index
    %33 = vector.load %arg5[%c6, %c0_16] : memref<8x512xf32, #tpu.memory_space<vmem>>, vector<1x512xf32>
    %34 = vector.broadcast %33 : vector<1x512xf32> to vector<8x512xf32>
    %35 = arith.mulf %32, %34 : vector<8x512xf32>
    %c56 = arith.constant 56 : index
    %c0_17 = arith.constant 0 : index
    %36 = vector.load %arg7[%c56, %c0_17] : memref<72x512xf32, #tpu.memory_space<vmem>>, vector<8x512xf32>
    tpu.vector_store %arg7[%c56, %c0_17], %35 {strides = array<i32>} : memref<72x512xf32, #tpu.memory_space<vmem>>, vector<8x512xf32>,
    %c495_i32 = arith.constant 495 : i32
    %37 = tpu.dynamic_rotate %0 by %c495_i32 dim 1 : vector<8x512xf32>, i32 -> vector<8x512xf32>
    %c7 = arith.constant 7 : index
    %c0_18 = arith.constant 0 : index
    %38 = vector.load %arg5[%c7, %c0_18] : memref<8x512xf32, #tpu.memory_space<vmem>>, vector<1x512xf32>
    %39 = vector.broadcast %38 : vector<1x512xf32> to vector<8x512xf32>
    %40 = arith.mulf %37, %39 : vector<8x512xf32>
    %c64 = arith.constant 64 : index
    %c0_19 = arith.constant 0 : index
    %41 = vector.load %arg7[%c64, %c0_19] : memref<72x512xf32, #tpu.memory_space<vmem>>, vector<8x512xf32>
    tpu.vector_store %arg7[%c64, %c0_19], %40 {strides = array<i32>} : memref<72x512xf32, #tpu.memory_space<vmem>>, vector<8x512xf32>,
    %c0_20 = arith.constant 0 : index
    %c0_21 = arith.constant 0 : index
    %42 = vector.load %arg2[%c0_20, %c0_21] : memref<8x72xf32, #tpu.memory_space<vmem>>, vector<8x72xf32>
    %c0_22 = arith.constant 0 : index
    %c0_23 = arith.constant 0 : index
    %43 = vector.load %arg7[%c0_22, %c0_23] : memref<72x512xf32, #tpu.memory_space<vmem>>, vector<72x512xf32>
    %cst = arith.constant dense<0.000000e+00> : vector<8x512xf32>
    %44 = tpu.matmul %42, %43, %cst {dimension_numbers = #tpu.dot_dimension_numbers<[1], [0], [0], [1], [0, 0, 1, 1], [], []>} : vector<8x72xf32>, vector<72x512xf32>, vector<8x512xf32> -> vector<8x512xf32>
    %cst_24 = arith.constant dense<0.000000e+00> : vector<8xf32>
    %45 = vector.multi_reduction <add>, %44, %cst_24 [1] : vector<8x512xf32> to vector<8xf32>
    %46 = vector.shape_cast %45 : vector<8xf32> to vector<8x1xf32>
    %cst_25 = arith.constant 0.001953125 : f32
    %47 = vector.broadcast %cst_25 : f32 to vector<8x1xf32>
    %48 = arith.mulf %46, %47 : vector<8x1xf32>
    %49 = arith.mulf %44, %44 : vector<8x512xf32>
    %cst_26 = arith.constant dense<0.000000e+00> : vector<8xf32>
    %50 = vector.multi_reduction <add>, %49, %cst_26 [1] : vector<8x512xf32> to vector<8xf32>
    %51 = vector.shape_cast %50 : vector<8xf32> to vector<8x1xf32>
    %cst_27 = arith.constant 0.001953125 : f32
    %52 = vector.broadcast %cst_27 : f32 to vector<8x1xf32>
    %53 = arith.mulf %51, %52 : vector<8x1xf32>
    %54 = arith.mulf %48, %48 : vector<8x1xf32>
    %55 = arith.subf %53, %54 : vector<8x1xf32>
    %cst_28 = arith.constant 0.000000e+00 : f32
    %56 = vector.broadcast %cst_28 : f32 to vector<8x1xf32>
    %57 = arith.maximumf %55, %56 : vector<8x1xf32>
    %c0_29 = arith.constant 0 : index
    %c0_30 = arith.constant 0 : index
    %58 = vector.load %arg4[%c0_29, %c0_30] : memref<8x4xf32, #tpu.memory_space<vmem>>, vector<8x1xf32>
    %cst_31 = arith.constant 9.99999974E-6 : f32
    %59 = vector.broadcast %cst_31 : f32 to vector<8x1xf32>
    %60 = arith.addf %57, %59 : vector<8x1xf32>
    %61 = math.rsqrt %60 : vector<8x1xf32>
    %62 = arith.mulf %58, %61 : vector<8x1xf32>
    %c0_32 = arith.constant 0 : index
    %c1_33 = arith.constant 1 : index
    %63 = vector.load %arg4[%c0_32, %c1_33] : memref<8x4xf32, #tpu.memory_space<vmem>>, vector<8x1xf32>
    %64 = arith.mulf %48, %62 : vector<8x1xf32>
    %65 = arith.subf %63, %64 : vector<8x1xf32>
    %66 = vector.broadcast %62 : vector<8x1xf32> to vector<8x512xf32>
    %67 = arith.mulf %44, %66 : vector<8x512xf32>
    %68 = vector.broadcast %65 : vector<8x1xf32> to vector<8x512xf32>
    %69 = arith.addf %67, %68 : vector<8x512xf32>
    %cst_34 = arith.constant 0.000000e+00 : f32
    %70 = vector.broadcast %cst_34 : f32 to vector<8x512xf32>
    %71 = arith.maximumf %69, %70 : vector<8x512xf32>
    %c17_i32_35 = arith.constant 17 : i32
    %72 = tpu.dynamic_rotate %71 by %c17_i32_35 dim 1 : vector<8x512xf32>, i32 -> vector<8x512xf32>
    %c0_36 = arith.constant 0 : index
    %c0_37 = arith.constant 0 : index
    %73 = vector.load %arg5[%c0_36, %c0_37] : memref<8x512xf32, #tpu.memory_space<vmem>>, vector<1x512xf32>
    %74 = vector.broadcast %73 : vector<1x512xf32> to vector<8x512xf32>
    %75 = arith.mulf %72, %74 : vector<8x512xf32>
    %c0_38 = arith.constant 0 : index
    %c0_39 = arith.constant 0 : index
    %76 = vector.load %arg7[%c0_38, %c0_39] : memref<72x512xf32, #tpu.memory_space<vmem>>, vector<8x512xf32>
    tpu.vector_store %arg7[%c0_38, %c0_39], %75 {strides = array<i32>} : memref<72x512xf32, #tpu.memory_space<vmem>>, vector<8x512xf32>,
    %c16_i32_40 = arith.constant 16 : i32
    %77 = tpu.dynamic_rotate %71 by %c16_i32_40 dim 1 : vector<8x512xf32>, i32 -> vector<8x512xf32>
    %c1_41 = arith.constant 1 : index
    %c0_42 = arith.constant 0 : index
    %78 = vector.load %arg5[%c1_41, %c0_42] : memref<8x512xf32, #tpu.memory_space<vmem>>, vector<1x512xf32>
    %79 = vector.broadcast %78 : vector<1x512xf32> to vector<8x512xf32>
    %80 = arith.mulf %77, %79 : vector<8x512xf32>
    %c8_43 = arith.constant 8 : index
    %c0_44 = arith.constant 0 : index
    %81 = vector.load %arg7[%c8_43, %c0_44] : memref<72x512xf32, #tpu.memory_space<vmem>>, vector<8x512xf32>
    tpu.vector_store %arg7[%c8_43, %c0_44], %80 {strides = array<i32>} : memref<72x512xf32, #tpu.memory_space<vmem>>, vector<8x512xf32>,
    %c15_i32_45 = arith.constant 15 : i32
    %82 = tpu.dynamic_rotate %71 by %c15_i32_45 dim 1 : vector<8x512xf32>, i32 -> vector<8x512xf32>
    %c2_46 = arith.constant 2 : index
    %c0_47 = arith.constant 0 : index
    %83 = vector.load %arg5[%c2_46, %c0_47] : memref<8x512xf32, #tpu.memory_space<vmem>>, vector<1x512xf32>
    %84 = vector.broadcast %83 : vector<1x512xf32> to vector<8x512xf32>
    %85 = arith.mulf %82, %84 : vector<8x512xf32>
    %c16_48 = arith.constant 16 : index
    %c0_49 = arith.constant 0 : index
    %86 = vector.load %arg7[%c16_48, %c0_49] : memref<72x512xf32, #tpu.memory_space<vmem>>, vector<8x512xf32>
    tpu.vector_store %arg7[%c16_48, %c0_49], %85 {strides = array<i32>} : memref<72x512xf32, #tpu.memory_space<vmem>>, vector<8x512xf32>,
    %c1_i32_50 = arith.constant 1 : i32
    %87 = tpu.dynamic_rotate %71 by %c1_i32_50 dim 1 : vector<8x512xf32>, i32 -> vector<8x512xf32>
    %c3_51 = arith.constant 3 : index
    %c0_52 = arith.constant 0 : index
    %88 = vector.load %arg5[%c3_51, %c0_52] : memref<8x512xf32, #tpu.memory_space<vmem>>, vector<1x512xf32>
    %89 = vector.broadcast %88 : vector<1x512xf32> to vector<8x512xf32>
    %90 = arith.mulf %87, %89 : vector<8x512xf32>
    %c24_53 = arith.constant 24 : index
    %c0_54 = arith.constant 0 : index
    %91 = vector.load %arg7[%c24_53, %c0_54] : memref<72x512xf32, #tpu.memory_space<vmem>>, vector<8x512xf32>
    tpu.vector_store %arg7[%c24_53, %c0_54], %90 {strides = array<i32>} : memref<72x512xf32, #tpu.memory_space<vmem>>, vector<8x512xf32>,
    %c32_55 = arith.constant 32 : index
    %c0_56 = arith.constant 0 : index
    %92 = vector.load %arg7[%c32_55, %c0_56] : memref<72x512xf32, #tpu.memory_space<vmem>>, vector<8x512xf32>
    tpu.vector_store %arg7[%c32_55, %c0_56], %71 {strides = array<i32>} : memref<72x512xf32, #tpu.memory_space<vmem>>, vector<8x512xf32>,
    %c511_i32_57 = arith.constant 511 : i32
    %93 = tpu.dynamic_rotate %71 by %c511_i32_57 dim 1 : vector<8x512xf32>, i32 -> vector<8x512xf32>
    %c4_58 = arith.constant 4 : index
    %c0_59 = arith.constant 0 : index
    %94 = vector.load %arg5[%c4_58, %c0_59] : memref<8x512xf32, #tpu.memory_space<vmem>>, vector<1x512xf32>
    %95 = vector.broadcast %94 : vector<1x512xf32> to vector<8x512xf32>
    %96 = arith.mulf %93, %95 : vector<8x512xf32>
    %c40_60 = arith.constant 40 : index
    %c0_61 = arith.constant 0 : index
    %97 = vector.load %arg7[%c40_60, %c0_61] : memref<72x512xf32, #tpu.memory_space<vmem>>, vector<8x512xf32>
    tpu.vector_store %arg7[%c40_60, %c0_61], %96 {strides = array<i32>} : memref<72x512xf32, #tpu.memory_space<vmem>>, vector<8x512xf32>,
    %c497_i32_62 = arith.constant 497 : i32
    %98 = tpu.dynamic_rotate %71 by %c497_i32_62 dim 1 : vector<8x512xf32>, i32 -> vector<8x512xf32>
    %c5_63 = arith.constant 5 : index
    %c0_64 = arith.constant 0 : index
    %99 = vector.load %arg5[%c5_63, %c0_64] : memref<8x512xf32, #tpu.memory_space<vmem>>, vector<1x512xf32>
    %100 = vector.broadcast %99 : vector<1x512xf32> to vector<8x512xf32>
    %101 = arith.mulf %98, %100 : vector<8x512xf32>
    %c48_65 = arith.constant 48 : index
    %c0_66 = arith.constant 0 : index
    %102 = vector.load %arg7[%c48_65, %c0_66] : memref<72x512xf32, #tpu.memory_space<vmem>>, vector<8x512xf32>
    tpu.vector_store %arg7[%c48_65, %c0_66], %101 {strides = array<i32>} : memref<72x512xf32, #tpu.memory_space<vmem>>, vector<8x512xf32>,
    %c496_i32_67 = arith.constant 496 : i32
    %103 = tpu.dynamic_rotate %71 by %c496_i32_67 dim 1 : vector<8x512xf32>, i32 -> vector<8x512xf32>
    %c6_68 = arith.constant 6 : index
    %c0_69 = arith.constant 0 : index
    %104 = vector.load %arg5[%c6_68, %c0_69] : memref<8x512xf32, #tpu.memory_space<vmem>>, vector<1x512xf32>
    %105 = vector.broadcast %104 : vector<1x512xf32> to vector<8x512xf32>
    %106 = arith.mulf %103, %105 : vector<8x512xf32>
    %c56_70 = arith.constant 56 : index
    %c0_71 = arith.constant 0 : index
    %107 = vector.load %arg7[%c56_70, %c0_71] : memref<72x512xf32, #tpu.memory_space<vmem>>, vector<8x512xf32>
    tpu.vector_store %arg7[%c56_70, %c0_71], %106 {strides = array<i32>} : memref<72x512xf32, #tpu.memory_space<vmem>>, vector<8x512xf32>,
    %c495_i32_72 = arith.constant 495 : i32
    %108 = tpu.dynamic_rotate %71 by %c495_i32_72 dim 1 : vector<8x512xf32>, i32 -> vector<8x512xf32>
    %c7_73 = arith.constant 7 : index
    %c0_74 = arith.constant 0 : index
    %109 = vector.load %arg5[%c7_73, %c0_74] : memref<8x512xf32, #tpu.memory_space<vmem>>, vector<1x512xf32>
    %110 = vector.broadcast %109 : vector<1x512xf32> to vector<8x512xf32>
    %111 = arith.mulf %108, %110 : vector<8x512xf32>
    %c64_75 = arith.constant 64 : index
    %c0_76 = arith.constant 0 : index
    %112 = vector.load %arg7[%c64_75, %c0_76] : memref<72x512xf32, #tpu.memory_space<vmem>>, vector<8x512xf32>
    tpu.vector_store %arg7[%c64_75, %c0_76], %111 {strides = array<i32>} : memref<72x512xf32, #tpu.memory_space<vmem>>, vector<8x512xf32>,
    %c0_77 = arith.constant 0 : index
    %c0_78 = arith.constant 0 : index
    %113 = vector.load %arg3[%c0_77, %c0_78] : memref<8x72xf32, #tpu.memory_space<vmem>>, vector<8x72xf32>
    %c0_79 = arith.constant 0 : index
    %c0_80 = arith.constant 0 : index
    %114 = vector.load %arg7[%c0_79, %c0_80] : memref<72x512xf32, #tpu.memory_space<vmem>>, vector<72x512xf32>
    %cst_81 = arith.constant dense<0.000000e+00> : vector<8x512xf32>
    %115 = tpu.matmul %113, %114, %cst_81 {dimension_numbers = #tpu.dot_dimension_numbers<[1], [0], [0], [1], [0, 0, 1, 1], [], []>} : vector<8x72xf32>, vector<72x512xf32>, vector<8x512xf32> -> vector<8x512xf32>
    %cst_82 = arith.constant dense<0.000000e+00> : vector<8xf32>
    %116 = vector.multi_reduction <add>, %115, %cst_82 [1] : vector<8x512xf32> to vector<8xf32>
    %117 = vector.shape_cast %116 : vector<8xf32> to vector<8x1xf32>
    %cst_83 = arith.constant 0.001953125 : f32
    %118 = vector.broadcast %cst_83 : f32 to vector<8x1xf32>
    %119 = arith.mulf %117, %118 : vector<8x1xf32>
    %120 = arith.mulf %115, %115 : vector<8x512xf32>
    %cst_84 = arith.constant dense<0.000000e+00> : vector<8xf32>
    %121 = vector.multi_reduction <add>, %120, %cst_84 [1] : vector<8x512xf32> to vector<8xf32>
    %122 = vector.shape_cast %121 : vector<8xf32> to vector<8x1xf32>
    %cst_85 = arith.constant 0.001953125 : f32
    %123 = vector.broadcast %cst_85 : f32 to vector<8x1xf32>
    %124 = arith.mulf %122, %123 : vector<8x1xf32>
    %125 = arith.mulf %119, %119 : vector<8x1xf32>
    %126 = arith.subf %124, %125 : vector<8x1xf32>
    %cst_86 = arith.constant 0.000000e+00 : f32
    %127 = vector.broadcast %cst_86 : f32 to vector<8x1xf32>
    %128 = arith.maximumf %126, %127 : vector<8x1xf32>
    %c0_87 = arith.constant 0 : index
    %c2_88 = arith.constant 2 : index
    %129 = vector.load %arg4[%c0_87, %c2_88] : memref<8x4xf32, #tpu.memory_space<vmem>>, vector<8x1xf32>
    %cst_89 = arith.constant 9.99999974E-6 : f32
    %130 = vector.broadcast %cst_89 : f32 to vector<8x1xf32>
    %131 = arith.addf %128, %130 : vector<8x1xf32>
    %132 = math.rsqrt %131 : vector<8x1xf32>
    %133 = arith.mulf %129, %132 : vector<8x1xf32>
    %c0_90 = arith.constant 0 : index
    %c3_91 = arith.constant 3 : index
    %134 = vector.load %arg4[%c0_90, %c3_91] : memref<8x4xf32, #tpu.memory_space<vmem>>, vector<8x1xf32>
    %135 = arith.mulf %119, %133 : vector<8x1xf32>
    %136 = arith.subf %134, %135 : vector<8x1xf32>
    %137 = vector.broadcast %133 : vector<8x1xf32> to vector<8x512xf32>
    %138 = arith.mulf %115, %137 : vector<8x512xf32>
    %139 = vector.broadcast %136 : vector<8x1xf32> to vector<8x512xf32>
    %140 = arith.addf %138, %139 : vector<8x512xf32>
    %141 = arith.addf %140, %0 : vector<8x512xf32>
    %cst_92 = arith.constant 0.000000e+00 : f32
    %142 = vector.broadcast %cst_92 : f32 to vector<8x512xf32>
    %143 = arith.maximumf %141, %142 : vector<8x512xf32>
    %c0_93 = arith.constant 0 : index
    %c0_94 = arith.constant 0 : index
    %144 = vector.load %arg6[%c0_93, %c0_94] : memref<8x512xf32, #tpu.memory_space<vmem>>, vector<8x512xf32>
    tpu.vector_store %arg6[%c0_93, %c0_94], %143 {strides = array<i32>} : memref<8x512xf32, #tpu.memory_space<vmem>>, vector<8x512xf32>,
    return
  }
  func.func @transform_0(%arg0: i32) -> (i32, i32) {
    %c0_i32 = arith.constant 0 : i32
    %c0_i32_0 = arith.constant 0 : i32
    %c0_i32_1 = arith.constant 0 : i32
    return %c0_i32, %c0_i32_0 : i32, i32
  }
  func.func @transform_1(%arg0: i32) -> (i32, i32) {
    %c0_i32 = arith.constant 0 : i32
    %c0_i32_0 = arith.constant 0 : i32
    %c0_i32_1 = arith.constant 0 : i32
    return %c0_i32, %c0_i32_0 : i32, i32
  }
  func.func @transform_2(%arg0: i32) -> (i32, i32) {
    %c0_i32 = arith.constant 0 : i32
    %c0_i32_0 = arith.constant 0 : i32
    %c0_i32_1 = arith.constant 0 : i32
    return %c0_i32, %c0_i32_0 : i32, i32
  }
  func.func @transform_3(%arg0: i32) -> (i32, i32) {
    %c0_i32 = arith.constant 0 : i32
    %c0_i32_0 = arith.constant 0 : i32
    %c0_i32_1 = arith.constant 0 : i32
    return %c0_i32, %c0_i32_0 : i32, i32
  }
  func.func @transform_4(%arg0: i32) -> (i32, i32) {
    %c0_i32 = arith.constant 0 : i32
    %c0_i32_0 = arith.constant 0 : i32
    %c0_i32_1 = arith.constant 0 : i32
    return %c0_i32, %c0_i32_0 : i32, i32
  }
  func.func @transform_5(%arg0: i32) -> (i32, i32) {
    %c0_i32 = arith.constant 0 : i32
    %c0_i32_0 = arith.constant 0 : i32
    %c0_i32_1 = arith.constant 0 : i32
    return %c0_i32, %c0_i32_0 : i32, i32
  }
}

</mosaic_0001>

<llo_original>
// kernel: tpu_custom_call.1
$region0: #{tpu_custom_call.1}
  #allocation0 [shape = 'u32[]', space=smem, size = 0x4, offset = 0x4, fixed_abs, tag = 'smem constant byte address 0x4 - core index']
  #allocation1 [shape = 'u32[144,128]{1,0:T(1,128)}', space=vmem, size = 0x12000, scoped, tag = 'internal scratch']
  #allocation2 [shape = 'f32[72,512]{1,0:T(8,128)}', space=vmem, size = 0x24000, scoped, tag = 'scratch operand']
  %s0 = inlined_call_operand.hbm [shape: f32[8,512], index: 0, kind: input, shape index: {}]
  %s1 = inlined_call_operand.vmem [shape: f32[8,72], index: 1, kind: input, shape index: {}]
  %s2 = inlined_call_operand.vmem [shape: f32[8,72], index: 2, kind: input, shape index: {}]
  %s3 = inlined_call_operand.vmem [shape: f32[8,4], index: 3, kind: input, shape index: {}]
  %s4 = inlined_call_operand.hbm [shape: f32[8,512], index: 4, kind: input, shape index: {}]
  %s5 = inlined_call_operand.hbm [shape: f32[8,512], index: 5, kind: output, shape index: {}]
  %s6 = sld [smem:[#allocation0]]
  $region38: #{tpu_custom_call.1} parent=0
    _
  %s8 = ssub.s32 1, %s6
  %s9 = scalar_select 0, %s8, %s6
  $region1: #{tpu_custom_call.1} parent=0
    #allocation3 [shape = 'u8[16384]{0}', space=vmem, size = 0x4000, scoped, tag = 'input window, operand 0, single buffered']
    #allocation4 [shape = 's32[1]{0}', space=sflag, size = 0x4, scoped, tag = 'scoped memory for tpu_custom_call.1']
    #allocation5 [shape = 's32[1]{0}', space=sflag, size = 0x4, scoped, tag = 'scoped memory for tpu_custom_call.1']
    #allocation6 [shape = 'u8[16384]{0}', space=vmem, size = 0x4000, scoped, tag = 'input window, operand 4, single buffered']
    #allocation7 [shape = 's32[1]{0}', space=sflag, size = 0x4, scoped, tag = 'scoped memory for tpu_custom_call.1']
    #allocation8 [shape = 'u8[16384]{0}', space=vmem, size = 0x4000, scoped, tag = 'output window, operand 0, single buffered']
    %10 = vsyncpa [#allocation4], 0
    %11 = vsyncpa [#allocation7], 0
    %12 = vsyncpa [#allocation5], 0
    // Predicated region
    $region2: #{tpu_custom_call.1} parent=1 // pred_check
      _
    $region3: #{tpu_custom_call.1} parent=1 // pred_check_branch
      %14 = sbr.rel (0) target = $region5
    $region4: #{tpu_custom_call.1} parent=1 // pred_region
      %s16 = ssub.s32 512, 512
      %17 = vsyncadd [#allocation4], %s16
      %s19 = sshll.u32 [#allocation3], 4
      %s20 = int_to_ptr.vmem [resolvable:$true] %s19
      %22 = dma.hbm_to_vmem [thread:$0]  %s0, 512, %s20, [#allocation4]
    $region5: #{tpu_custom_call.1} parent=1 // pred_fallthru
      _
    // Predicated region
    $region6: #{tpu_custom_call.1} parent=1 // pred_check
      _
    $region7: #{tpu_custom_call.1} parent=1 // pred_check_branch
      %24 = sbr.rel (0) target = $region9
    $region8: #{tpu_custom_call.1} parent=1 // pred_region
      _
    $region9: #{tpu_custom_call.1} parent=1 // pred_fallthru
      _
    // Predicated region
    $region10: #{tpu_custom_call.1} parent=1 // pred_check
      _
    $region11: #{tpu_custom_call.1} parent=1 // pred_check_branch
      %26 = sbr.rel (0) target = $region13
    $region12: #{tpu_custom_call.1} parent=1 // pred_region
      _
    $region13: #{tpu_custom_call.1} parent=1 // pred_fallthru
      _
    // Predicated region
    $region14: #{tpu_custom_call.1} parent=1 // pred_check
      _
    $region15: #{tpu_custom_call.1} parent=1 // pred_check_branch
      %28 = sbr.rel (0) target = $region17
    $region16: #{tpu_custom_call.1} parent=1 // pred_region
      _
    $region17: #{tpu_custom_call.1} parent=1 // pred_fallthru
      _
    // Predicated region
    $region18: #{tpu_custom_call.1} parent=1 // pred_check
      _
    $region19: #{tpu_custom_call.1} parent=1 // pred_check_branch
      %30 = sbr.rel (0) target = $region21
    $region20: #{tpu_custom_call.1} parent=1 // pred_region
      %s32 = ssub.s32 512, 512
      %33 = vsyncadd [#allocation7], %s32
      %s35 = sshll.u32 [#allocation6], 4
      %s36 = int_to_ptr.vmem [resolvable:$true] %s35
      %38 = dma.hbm_to_vmem [thread:$0]  %s4, 512, %s36, [#allocation7]
    $region21: #{tpu_custom_call.1} parent=1 // pred_fallthru
      _
    // Predicated region
    $region22: #{tpu_custom_call.1} parent=1 // pred_check
      _
    $region23: #{tpu_custom_call.1} parent=1 // pred_check_branch
      %40 = sbr.rel (0) target = $region25
    $region24: #{tpu_custom_call.1} parent=1 // pred_region
      %41 = dma.done [#allocation4], 512
    $region25: #{tpu_custom_call.1} parent=1 // pred_fallthru
      _
    // Predicated region
    $region26: #{tpu_custom_call.1} parent=1 // pred_check
      _
    $region27: #{tpu_custom_call.1} parent=1 // pred_check_branch
      %43 = sbr.rel (0) target = $region29
    $region28: #{tpu_custom_call.1} parent=1 // pred_region
      %44 = dma.done [#allocation7], 512
    $region29: #{tpu_custom_call.1} parent=1 // pred_fallthru
      _
    %v45 = vld [vmem:[#allocation3] sm:$0xff]
    %v46 = vld [vmem:[#allocation3 + $0x8] sm:$0xff]
    %v47 = vld [vmem:[#allocation3 + $0x10] sm:$0xff]
    %v48 = vld [vmem:[#allocation3 + $0x18] sm:$0xff]
    %49 = vrot.lane.b32.xlu0 %v45, 17
    %v50 = vpop.permute.xlu0 %49
    %51 = vrot.lane.b32.xlu0 %v46, 17
    %v52 = vpop.permute.xlu0 %51
    %53 = vrot.lane.b32.xlu0 %v47, 17
    %v54 = vpop.permute.xlu0 %53
    %55 = vrot.lane.b32.xlu0 %v48, 17
    %v56 = vpop.permute.xlu0 %55
    %v57 = vlaneseq
    %v58 = vand.u32 %v57, 127
    %vm59 = vcmp.lt.s32.totalorder %v58, 17
    %v60 = vsel %vm59, %v54, %v56
    %v61 = vsel %vm59, %v52, %v54
    %v62 = vsel %vm59, %v50, %v52
    %v63 = vsel %vm59, %v56, %v50
    %v64 = vld [vmem:[#allocation6] ss:$8 sm:$0xf]
    %v66 = vlaneseq
    %v67 = vshrl.u32 %v66, 7
    %v68 = vsub.s32 0, %v67
    %v69 = vrot.slane %v64, %v68
    %v70 = vlaneseq
    %v71 = vshrl.u32 %v70, 7
    %v72 = vsub.s32 1, %v71
    %v73 = vrot.slane %v64, %v72
    %v74 = vlaneseq
    %v75 = vshrl.u32 %v74, 7
    %v76 = vsub.s32 2, %v75
    %v77 = vrot.slane %v64, %v76
    %v78 = vlaneseq
    %v79 = vshrl.u32 %v78, 7
    %v80 = vsub.s32 3, %v79
    %v81 = vrot.slane %v64, %v80
    %v86 = vmul.f32 %v63, %v69
    %v87 = vmul.f32 %v62, %v73
    %v88 = vmul.f32 %v61, %v77
    %v89 = vmul.f32 %v60, %v81
    %90 = vst [vmem:[#allocation2] sm:$0xff] %v86
    %91 = vst [vmem:[#allocation2 + $0x8] sm:$0xff] %v87
    %92 = vst [vmem:[#allocation2 + $0x10] sm:$0xff] %v88
    %93 = vst [vmem:[#allocation2 + $0x18] sm:$0xff] %v89
    %94 = vrot.lane.b32.xlu0 %v45, 16
    %v95 = vpop.permute.xlu0 %94
    %96 = vrot.lane.b32.xlu0 %v46, 16
    %v97 = vpop.permute.xlu0 %96
    %98 = vrot.lane.b32.xlu0 %v47, 16
    %v99 = vpop.permute.xlu0 %98
    %100 = vrot.lane.b32.xlu0 %v48, 16
    %v101 = vpop.permute.xlu0 %100
    %vm102 = vcmp.lt.s32.totalorder %v58, 16
    %v103 = vsel %vm102, %v99, %v101
    %v104 = vsel %vm102, %v97, %v99
    %v105 = vsel %vm102, %v95, %v97
    %v106 = vsel %vm102, %v101, %v95
    %s107 = scalar_lea.vmem [#allocation6], 1
    %v108 = vld [vmem:[%s107] ss:$8 sm:$0xf]
    %v110 = vlaneseq
    %v111 = vshrl.u32 %v110, 7
    %v112 = vsub.s32 0, %v111
    %v113 = vrot.slane %v108, %v112
    %v114 = vlaneseq
    %v115 = vshrl.u32 %v114, 7
    %v116 = vsub.s32 1, %v115
    %v117 = vrot.slane %v108, %v116
    %v118 = vlaneseq
    %v119 = vshrl.u32 %v118, 7
    %v120 = vsub.s32 2, %v119
    %v121 = vrot.slane %v108, %v120
    %v122 = vlaneseq
    %v123 = vshrl.u32 %v122, 7
    %v124 = vsub.s32 3, %v123
    %v125 = vrot.slane %v108, %v124
    %v130 = vmul.f32 %v106, %v113
    %v131 = vmul.f32 %v105, %v117
    %v132 = vmul.f32 %v104, %v121
    %v133 = vmul.f32 %v103, %v125
    %134 = vst [vmem:[#allocation2 + $0x20] sm:$0xff] %v130
    %135 = vst [vmem:[#allocation2 + $0x28] sm:$0xff] %v131
    %136 = vst [vmem:[#allocation2 + $0x30] sm:$0xff] %v132
    %137 = vst [vmem:[#allocation2 + $0x38] sm:$0xff] %v133
    %138 = vrot.lane.b32.xlu0 %v45, 15
    %v139 = vpop.permute.xlu0 %138
    %140 = vrot.lane.b32.xlu0 %v46, 15
    %v141 = vpop.permute.xlu0 %140
    %142 = vrot.lane.b32.xlu0 %v47, 15
    %v143 = vpop.permute.xlu0 %142
    %144 = vrot.lane.b32.xlu0 %v48, 15
    %v145 = vpop.permute.xlu0 %144
    %vm146 = vcmp.lt.s32.totalorder %v58, 15
    %v147 = vsel %vm146, %v143, %v145
    %v148 = vsel %vm146, %v141, %v143
    %v149 = vsel %vm146, %v139, %v141
    %v150 = vsel %vm146, %v145, %v139
    %s151 = scalar_lea.vmem [#allocation6], 2
    %v152 = vld [vmem:[%s151] ss:$8 sm:$0xf]
    %v154 = vlaneseq
    %v155 = vshrl.u32 %v154, 7
    %v156 = vsub.s32 0, %v155
    %v157 = vrot.slane %v152, %v156
    %v158 = vlaneseq
    %v159 = vshrl.u32 %v158, 7
    %v160 = vsub.s32 1, %v159
    %v161 = vrot.slane %v152, %v160
    %v162 = vlaneseq
    %v163 = vshrl.u32 %v162, 7
    %v164 = vsub.s32 2, %v163
    %v165 = vrot.slane %v152, %v164
    %v166 = vlaneseq
    %v167 = vshrl.u32 %v166, 7
    %v168 = vsub.s32 3, %v167
    %v169 = vrot.slane %v152, %v168
    %v174 = vmul.f32 %v150, %v157
    %v175 = vmul.f32 %v149, %v161
    %v176 = vmul.f32 %v148, %v165
    %v177 = vmul.f32 %v147, %v169
    %178 = vst [vmem:[#allocation2 + $0x40] sm:$0xff] %v174
    %179 = vst [vmem:[#allocation2 + $0x48] sm:$0xff] %v175
    %180 = vst [vmem:[#allocation2 + $0x50] sm:$0xff] %v176
    %181 = vst [vmem:[#allocation2 + $0x58] sm:$0xff] %v177
    %182 = vrot.lane.b32.xlu0 %v45, 1
    %v183 = vpop.permute.xlu0 %182
    %184 = vrot.lane.b32.xlu0 %v46, 1
    %v185 = vpop.permute.xlu0 %184
    %186 = vrot.lane.b32.xlu0 %v47, 1
    %v187 = vpop.permute.xlu0 %186
    %188 = vrot.lane.b32.xlu0 %v48, 1
    %v189 = vpop.permute.xlu0 %188
    %vm190 = vcmp.lt.s32.totalorder %v58, 1
    %v191 = vsel %vm190, %v187, %v189
    %v192 = vsel %vm190, %v185, %v187
    %v193 = vsel %vm190, %v183, %v185
    %v194 = vsel %vm190, %v189, %v183
    %s195 = scalar_lea.vmem [#allocation6], 3
    %v196 = vld [vmem:[%s195] ss:$8 sm:$0xf]
    %v198 = vlaneseq
    %v199 = vshrl.u32 %v198, 7
    %v200 = vsub.s32 0, %v199
    %v201 = vrot.slane %v196, %v200
    %v202 = vlaneseq
    %v203 = vshrl.u32 %v202, 7
    %v204 = vsub.s32 1, %v203
    %v205 = vrot.slane %v196, %v204
    %v206 = vlaneseq
    %v207 = vshrl.u32 %v206, 7
    %v208 = vsub.s32 2, %v207
    %v209 = vrot.slane %v196, %v208
    %v210 = vlaneseq
    %v211 = vshrl.u32 %v210, 7
    %v212 = vsub.s32 3, %v211
    %v213 = vrot.slane %v196, %v212
    %v218 = vmul.f32 %v194, %v201
    %v219 = vmul.f32 %v193, %v205
    %v220 = vmul.f32 %v192, %v209
    %v221 = vmul.f32 %v191, %v213
    %222 = vst [vmem:[#allocation2 + $0x60] sm:$0xff] %v218
    %223 = vst [vmem:[#allocation2 + $0x68] sm:$0xff] %v219
    %224 = vst [vmem:[#allocation2 + $0x70] sm:$0xff] %v220
    %225 = vst [vmem:[#allocation2 + $0x78] sm:$0xff] %v221
    %226 = vst [vmem:[#allocation2 + $0x80] sm:$0xff] %v45
    %227 = vst [vmem:[#allocation2 + $0x88] sm:$0xff] %v46
    %228 = vst [vmem:[#allocation2 + $0x90] sm:$0xff] %v47
    %229 = vst [vmem:[#allocation2 + $0x98] sm:$0xff] %v48
    %230 = vrot.lane.b32.xlu0 %v45, 127
    %v231 = vpop.permute.xlu0 %230
    %232 = vrot.lane.b32.xlu0 %v46, 127
    %v233 = vpop.permute.xlu0 %232
    %234 = vrot.lane.b32.xlu0 %v47, 127
    %v235 = vpop.permute.xlu0 %234
    %236 = vrot.lane.b32.xlu0 %v48, 127
    %v237 = vpop.permute.xlu0 %236
    %vm238 = vcmp.lt.s32.totalorder %v58, 127
    %v239 = vsel %vm238, %v235, %v237
    %v240 = vsel %vm238, %v233, %v235
    %v241 = vsel %vm238, %v231, %v233
    %v242 = vsel %vm238, %v237, %v231
    %s243 = scalar_lea.vmem [#allocation6], 4
    %v244 = vld [vmem:[%s243] ss:$8 sm:$0xf]
    %v246 = vlaneseq
    %v247 = vshrl.u32 %v246, 7
    %v248 = vsub.s32 0, %v247
    %v249 = vrot.slane %v244, %v248
    %v250 = vlaneseq
    %v251 = vshrl.u32 %v250, 7
    %v252 = vsub.s32 1, %v251
    %v253 = vrot.slane %v244, %v252
    %v254 = vlaneseq
    %v255 = vshrl.u32 %v254, 7
    %v256 = vsub.s32 2, %v255
    %v257 = vrot.slane %v244, %v256
    %v258 = vlaneseq
    %v259 = vshrl.u32 %v258, 7
    %v260 = vsub.s32 3, %v259
    %v261 = vrot.slane %v244, %v260
    %v266 = vmul.f32 %v241, %v249
    %v267 = vmul.f32 %v240, %v253
    %v268 = vmul.f32 %v239, %v257
    %v269 = vmul.f32 %v242, %v261
    %270 = vst [vmem:[#allocation2 + $0xa0] sm:$0xff] %v266
    %271 = vst [vmem:[#allocation2 + $0xa8] sm:$0xff] %v267
    %272 = vst [vmem:[#allocation2 + $0xb0] sm:$0xff] %v268
    %273 = vst [vmem:[#allocation2 + $0xb8] sm:$0xff] %v269
    %274 = vrot.lane.b32.xlu0 %v45, 113
    %v275 = vpop.permute.xlu0 %274
    %276 = vrot.lane.b32.xlu0 %v46, 113
    %v277 = vpop.permute.xlu0 %276
    %278 = vrot.lane.b32.xlu0 %v47, 113
    %v279 = vpop.permute.xlu0 %278
    %280 = vrot.lane.b32.xlu0 %v48, 113
    %v281 = vpop.permute.xlu0 %280
    %vm282 = vcmp.lt.s32.totalorder %v58, 113
    %v283 = vsel %vm282, %v279, %v281
    %v284 = vsel %vm282, %v277, %v279
    %v285 = vsel %vm282, %v275, %v277
    %v286 = vsel %vm282, %v281, %v275
    %s287 = scalar_lea.vmem [#allocation6], 5
    %v288 = vld [vmem:[%s287] ss:$8 sm:$0xf]
    %v290 = vlaneseq
    %v291 = vshrl.u32 %v290, 7
    %v292 = vsub.s32 0, %v291
    %v293 = vrot.slane %v288, %v292
    %v294 = vlaneseq
    %v295 = vshrl.u32 %v294, 7
    %v296 = vsub.s32 1, %v295
    %v297 = vrot.slane %v288, %v296
    %v298 = vlaneseq
    %v299 = vshrl.u32 %v298, 7
    %v300 = vsub.s32 2, %v299
    %v301 = vrot.slane %v288, %v300
    %v302 = vlaneseq
    %v303 = vshrl.u32 %v302, 7
    %v304 = vsub.s32 3, %v303
    %v305 = vrot.slane %v288, %v304
    %v310 = vmul.f32 %v285, %v293
    %v311 = vmul.f32 %v284, %v297
    %v312 = vmul.f32 %v283, %v301
    %v313 = vmul.f32 %v286, %v305
    %314 = vst [vmem:[#allocation2 + $0xc0] sm:$0xff] %v310
    %315 = vst [vmem:[#allocation2 + $0xc8] sm:$0xff] %v311
    %316 = vst [vmem:[#allocation2 + $0xd0] sm:$0xff] %v312
    %317 = vst [vmem:[#allocation2 + $0xd8] sm:$0xff] %v313
    %318 = vrot.lane.b32.xlu0 %v45, 112
    %v319 = vpop.permute.xlu0 %318
    %320 = vrot.lane.b32.xlu0 %v46, 112
    %v321 = vpop.permute.xlu0 %320
    %322 = vrot.lane.b32.xlu0 %v47, 112
    %v323 = vpop.permute.xlu0 %322
    %324 = vrot.lane.b32.xlu0 %v48, 112
    %v325 = vpop.permute.xlu0 %324
    %vm326 = vcmp.lt.s32.totalorder %v58, 112
    %v327 = vsel %vm326, %v323, %v325
    %v328 = vsel %vm326, %v321, %v323
    %v329 = vsel %vm326, %v319, %v321
    %v330 = vsel %vm326, %v325, %v319
    %s331 = scalar_lea.vmem [#allocation6], 6
    %v332 = vld [vmem:[%s331] ss:$8 sm:$0xf]
    %v334 = vlaneseq
    %v335 = vshrl.u32 %v334, 7
    %v336 = vsub.s32 0, %v335
    %v337 = vrot.slane %v332, %v336
    %v338 = vlaneseq
    %v339 = vshrl.u32 %v338, 7
    %v340 = vsub.s32 1, %v339
    %v341 = vrot.slane %v332, %v340
    %v342 = vlaneseq
    %v343 = vshrl.u32 %v342, 7
    %v344 = vsub.s32 2, %v343
    %v345 = vrot.slane %v332, %v344
    %v346 = vlaneseq
    %v347 = vshrl.u32 %v346, 7
    %v348 = vsub.s32 3, %v347
    %v349 = vrot.slane %v332, %v348
    %v354 = vmul.f32 %v329, %v337
    %v355 = vmul.f32 %v328, %v341
    %v356 = vmul.f32 %v327, %v345
    %v357 = vmul.f32 %v330, %v349
    %358 = vst [vmem:[#allocation2 + $0xe0] sm:$0xff] %v354
    %359 = vst [vmem:[#allocation2 + $0xe8] sm:$0xff] %v355
    %360 = vst [vmem:[#allocation2 + $0xf0] sm:$0xff] %v356
    %361 = vst [vmem:[#allocation2 + $0xf8] sm:$0xff] %v357
    %362 = vrot.lane.b32.xlu0 %v45, 111
    %v363 = vpop.permute.xlu0 %362
    %364 = vrot.lane.b32.xlu0 %v46, 111
    %v365 = vpop.permute.xlu0 %364
    %366 = vrot.lane.b32.xlu0 %v47, 111
    %v367 = vpop.permute.xlu0 %366
    %368 = vrot.lane.b32.xlu0 %v48, 111
    %v369 = vpop.permute.xlu0 %368
    %vm370 = vcmp.lt.s32.totalorder %v58, 111
    %v371 = vsel %vm370, %v367, %v369
    %v372 = vsel %vm370, %v365, %v367
    %v373 = vsel %vm370, %v363, %v365
    %v374 = vsel %vm370, %v369, %v363
    %s375 = scalar_lea.vmem [#allocation6], 7
    %v376 = vld [vmem:[%s375] ss:$8 sm:$0xf]
    %v378 = vlaneseq
    %v379 = vshrl.u32 %v378, 7
    %v380 = vsub.s32 0, %v379
    %v381 = vrot.slane %v376, %v380
    %v382 = vlaneseq
    %v383 = vshrl.u32 %v382, 7
    %v384 = vsub.s32 1, %v383
    %v385 = vrot.slane %v376, %v384
    %v386 = vlaneseq
    %v387 = vshrl.u32 %v386, 7
    %v388 = vsub.s32 2, %v387
    %v389 = vrot.slane %v376, %v388
    %v390 = vlaneseq
    %v391 = vshrl.u32 %v390, 7
    %v392 = vsub.s32 3, %v391
    %v393 = vrot.slane %v376, %v392
    %v398 = vmul.f32 %v373, %v381
    %v399 = vmul.f32 %v372, %v385
    %v400 = vmul.f32 %v371, %v389
    %v401 = vmul.f32 %v374, %v393
    %402 = vst [vmem:[#allocation2 + $0x100] sm:$0xff] %v398
    %403 = vst [vmem:[#allocation2 + $0x108] sm:$0xff] %v399
    %404 = vst [vmem:[#allocation2 + $0x110] sm:$0xff] %v400
    %405 = vst [vmem:[#allocation2 + $0x118] sm:$0xff] %v401
    %v406 = vld [vmem:[%s1] sm:$0xff]
    %v407 = vld [vmem:[#allocation2] sm:$0xff]
    %v408 = vld [vmem:[#allocation2 + $0x8] sm:$0xff]
    %v409 = vld [vmem:[#allocation2 + $0x10] sm:$0xff]
    %v410 = vld [vmem:[#allocation2 + $0x18] sm:$0xff]
    %v411 = vld [vmem:[#allocation2 + $0x20] sm:$0xff]
    %v412 = vld [vmem:[#allocation2 + $0x28] sm:$0xff]
    %v413 = vld [vmem:[#allocation2 + $0x30] sm:$0xff]
    %v414 = vld [vmem:[#allocation2 + $0x38] sm:$0xff]
    %v415 = vld [vmem:[#allocation2 + $0x40] sm:$0xff]
    %v416 = vld [vmem:[#allocation2 + $0x48] sm:$0xff]
    %v417 = vld [vmem:[#allocation2 + $0x50] sm:$0xff]
    %v418 = vld [vmem:[#allocation2 + $0x58] sm:$0xff]
    %v419 = vld [vmem:[#allocation2 + $0x60] sm:$0xff]
    %v420 = vld [vmem:[#allocation2 + $0x68] sm:$0xff]
    %v421 = vld [vmem:[#allocation2 + $0x70] sm:$0xff]
    %v422 = vld [vmem:[#allocation2 + $0x78] sm:$0xff]
    %v423 = vld [vmem:[#allocation2 + $0x80] sm:$0xff]
    %v424 = vld [vmem:[#allocation2 + $0x88] sm:$0xff]
    %v425 = vld [vmem:[#allocation2 + $0x90] sm:$0xff]
    %v426 = vld [vmem:[#allocation2 + $0x98] sm:$0xff]
    %v427 = vld [vmem:[#allocation2 + $0xa0] sm:$0xff]
    %v428 = vld [vmem:[#allocation2 + $0xa8] sm:$0xff]
    %v429 = vld [vmem:[#allocation2 + $0xb0] sm:$0xff]
    %v430 = vld [vmem:[#allocation2 + $0xb8] sm:$0xff]
    %v431 = vld [vmem:[#allocation2 + $0xc0] sm:$0xff]
    %v432 = vld [vmem:[#allocation2 + $0xc8] sm:$0xff]
    %v433 = vld [vmem:[#allocation2 + $0xd0] sm:$0xff]
    %v434 = vld [vmem:[#allocation2 + $0xd8] sm:$0xff]
    %v435 = vld [vmem:[#allocation2 + $0xe0] sm:$0xff]
    %v436 = vld [vmem:[#allocation2 + $0xe8] sm:$0xff]
    %v437 = vld [vmem:[#allocation2 + $0xf0] sm:$0xff]
    %v438 = vld [vmem:[#allocation2 + $0xf8] sm:$0xff]
    %v439 = vld [vmem:[#allocation2 + $0x100] sm:$0xff]
    %v440 = vld [vmem:[#allocation2 + $0x108] sm:$0xff]
    %v441 = vld [vmem:[#allocation2 + $0x110] sm:$0xff]
    %v442 = vld [vmem:[#allocation2 + $0x118] sm:$0xff]
    %vm443 = vcmask 588800
    %v445 = vsel %vm443, %v406, 0
    %447 = vmatprep.subr.mxu0 %v408
    %448 = vmatpush1.msra.mxu0 %v407
    %449 = vmatprep.subr.mxu0 %v412
    %450 = vmatpush1.msra.mxu0 %v411
    %451 = vmatprep.subr.mxu0 %v416
    %452 = vmatpush1.msra.mxu0 %v415
    %453 = vmatprep.subr.mxu0 %v420
    %454 = vmatpush1.msra.mxu0 %v419
    %455 = vmatprep.subr.mxu0 %v424
    %456 = vmatpush1.msra.mxu0 %v423
    %457 = vmatprep.subr.mxu0 %v428
    %458 = vmatpush1.msra.mxu0 %v427
    %459 = vmatprep.subr.mxu0 %v432
    %460 = vmatpush1.msra.mxu0 %v431
    %461 = vmatprep.subr.mxu0 %v436
    %462 = vmatpush1.msra.mxu0 %v435
    %463 = vmatprep.subr.mxu0 %v440
    %464 = vmatpush1.msra.mxu0 %v439
    %465 = vmatprep.subr.mxu0 0.0
    %466 = vmatpush1.msra.mxu0 0.0
    %467 = vmatprep.subr.mxu0 0.0
    %468 = vmatpush1.msra.mxu0 0.0
    %469 = vmatprep.subr.mxu0 0.0
    %470 = vmatpush1.msra.mxu0 0.0
    %471 = vmatprep.subr.mxu0 0.0
    %472 = vmatpush1.msra.mxu0 0.0
    %473 = vmatprep.subr.mxu0 0.0
    %474 = vmatpush1.msra.mxu0 0.0
    %475 = vmatprep.subr.mxu0 0.0
    %476 = vmatpush1.msra.mxu0 0.0
    %477 = vmatprep.subr.mxu0 0.0
    %478 = vmatpush1.msra.mxu0 0.0
    %479 = vmatprep.subr.mxu0 0.0
    %480 = vmatpush1.msra.mxu0 0.0
    %481 = vmatprep.subr.mxu0 0.0
    %482 = vmatpush1.msra.mxu0 0.0
    %483 = vmatprep.subr.mxu0 0.0
    %484 = vmatpush1.msra.mxu0 0.0
    %485 = vmatprep.subr.mxu0 0.0
    %486 = vmatpush1.msra.mxu0 0.0
    %487 = vmatprep.subr.mxu0 0.0
    %488 = vmatpush1.msra.mxu0 0.0
    %489 = vmatprep.subr.mxu0 0.0
    %490 = vmatpush1.msra.mxu0 0.0
    %491 = vmatprep.subr.mxu0 0.0
    %492 = vmatpush1.msra.mxu0 0.0
    %493 = vmatprep.subr.mxu0 0.0
    %494 = vmatpush1.msra.mxu0 0.0
    %495 = vmatprep.subr.mxu0 0.0
    %496 = vmatpush1.msra.mxu0 0.0
    %497 = vmatprep.subr.mxu0 0.0
    %498 = vmatpush1.msra.mxu0 0.0
    %499 = vmatprep.subr.mxu0 0.0
    %500 = vmatpush1.msra.mxu0 0.0
    %501 = vmatprep.subr.mxu0 0.0
    %502 = vmatpush1.msra.mxu0 0.0
    %503 = vmatprep.subr.mxu0 0.0
    %504 = vmatpush1.msra.mxu0 0.0
    %505 = vmatprep.subr.mxu0 0.0
    %506 = vmatpush1.msra.mxu0 0.0
    %507 = vmatprep.subr.mxu0 0.0
    %508 = vmatpush1.msra.mxu0 0.0
    %509 = vmatprep.subr.mxu0 0.0
    %510 = vmatpush1.msra.mxu0 0.0
    %511 = vmatprep.mubr.f32.mxu0 0.0
    %512 = vmatmul.mubr.f32.gmra.mrb[0].mxu0 %v445
    %v513 = vpop.f32.mrb[0].mxu0
    %v514 = vadd.f32 0.0, %v513
    %v515 = vpop.f32.mrb[0].mxu0
    %v516 = vadd.f32 0.0, %v515
    %517 = vdwg.mxu0
    %518 = vmatprep.subr.mxu0 %v410
    %519 = vmatpush1.msra.mxu0 %v409
    %520 = vmatprep.subr.mxu0 %v414
    %521 = vmatpush1.msra.mxu0 %v413
    %522 = vmatprep.subr.mxu0 %v418
    %523 = vmatpush1.msra.mxu0 %v417
    %524 = vmatprep.subr.mxu0 %v422
    %525 = vmatpush1.msra.mxu0 %v421
    %526 = vmatprep.subr.mxu0 %v426
    %527 = vmatpush1.msra.mxu0 %v425
    %528 = vmatprep.subr.mxu0 %v430
    %529 = vmatpush1.msra.mxu0 %v429
    %530 = vmatprep.subr.mxu0 %v434
    %531 = vmatpush1.msra.mxu0 %v433
    %532 = vmatprep.subr.mxu0 %v438
    %533 = vmatpush1.msra.mxu0 %v437
    %534 = vmatprep.subr.mxu0 %v442
    %535 = vmatpush1.msra.mxu0 %v441
    %536 = vmatprep.subr.mxu0 0.0
    %537 = vmatpush1.msra.mxu0 0.0
    %538 = vmatprep.subr.mxu0 0.0
    %539 = vmatpush1.msra.mxu0 0.0
    %540 = vmatprep.subr.mxu0 0.0
    %541 = vmatpush1.msra.mxu0 0.0
    %542 = vmatprep.subr.mxu0 0.0
    %543 = vmatpush1.msra.mxu0 0.0
    %544 = vmatprep.subr.mxu0 0.0
    %545 = vmatpush1.msra.mxu0 0.0
    %546 = vmatprep.subr.mxu0 0.0
    %547 = vmatpush1.msra.mxu0 0.0
    %548 = vmatprep.subr.mxu0 0.0
    %549 = vmatpush1.msra.mxu0 0.0
    %550 = vmatprep.subr.mxu0 0.0
    %551 = vmatpush1.msra.mxu0 0.0
    %552 = vmatprep.subr.mxu0 0.0
    %553 = vmatpush1.msra.mxu0 0.0
    %554 = vmatprep.subr.mxu0 0.0
    %555 = vmatpush1.msra.mxu0 0.0
    %556 = vmatprep.subr.mxu0 0.0
    %557 = vmatpush1.msra.mxu0 0.0
    %558 = vmatprep.subr.mxu0 0.0
    %559 = vmatpush1.msra.mxu0 0.0
    %560 = vmatprep.subr.mxu0 0.0
    %561 = vmatpush1.msra.mxu0 0.0
    %562 = vmatprep.subr.mxu0 0.0
    %563 = vmatpush1.msra.mxu0 0.0
    %564 = vmatprep.subr.mxu0 0.0
    %565 = vmatpush1.msra.mxu0 0.0
    %566 = vmatprep.subr.mxu0 0.0
    %567 = vmatpush1.msra.mxu0 0.0
    %568 = vmatprep.subr.mxu0 0.0
    %569 = vmatpush1.msra.mxu0 0.0
    %570 = vmatprep.subr.mxu0 0.0
    %571 = vmatpush1.msra.mxu0 0.0
    %572 = vmatprep.subr.mxu0 0.0
    %573 = vmatpush1.msra.mxu0 0.0
    %574 = vmatprep.subr.mxu0 0.0
    %575 = vmatpush1.msra.mxu0 0.0
    %576 = vmatprep.subr.mxu0 0.0
    %577 = vmatpush1.msra.mxu0 0.0
    %578 = vmatprep.subr.mxu0 0.0
    %579 = vmatpush1.msra.mxu0 0.0
    %580 = vmatprep.subr.mxu0 0.0
    %581 = vmatpush1.msra.mxu0 0.0
    %582 = vmatprep.mubr.f32.mxu0 0.0
    %583 = vmatmul.mubr.f32.gmra.mrb[0].mxu0 %v445
    %v584 = vpop.f32.mrb[0].mxu0
    %v585 = vadd.f32 0.0, %v584
    %v586 = vpop.f32.mrb[0].mxu0
    %v587 = vadd.f32 0.0, %v586
    %588 = vdwg.mxu0
    %v589 = vadd.f32 %v514, %v516
    %v590 = vadd.f32 %v589, %v585
    %v591 = vadd.f32 %v590, %v587
    %592 = vadd.xlane.f32.xlu0 %v591
    %v593 = vpop.xlane.xlu0 %592
    %v594 = vmul.f32 %v593, 0.001953125
    %v595 = vmul.f32 %v514, %v514
    %v596 = vmul.f32 %v516, %v516
    %v597 = vmul.f32 %v585, %v585
    %v598 = vmul.f32 %v587, %v587
    %v599 = vadd.f32 %v595, %v596
    %v600 = vadd.f32 %v599, %v597
    %v601 = vadd.f32 %v600, %v598
    %602 = vadd.xlane.f32.xlu0 %v601
    %v603 = vpop.xlane.xlu0 %602
    %v604 = vmul.f32 %v603, 0.001953125
    %v605 = vmul.f32 %v594, %v594
    %v606 = vsub.f32 %v604, %v605
    %v607 = vmax.f32 %v606, 0.0
    %v608 = vld [vmem:[%s3] sm:$0xff]
    %v609 = vadd.f32 %v607, 1e-05
    %v610 = vrsqrt.pop %v609
    %v611 = vmul.f32 %v608, %v610
    %v612 = vmul.f32 %v594, %v611
    %614 = vrot.lane.b32.xlu0 %v612, 1
    %v615 = vpop.permute.xlu0 %614
    %v617 = vsub.f32 %v608, %v615
    %619 = vset.pattern.permute.xlu0 0
    %620 = vperm.xlu0 %619, %v611
    %v621 = vpop.permute.xlu0 %620
    %v623 = vmul.f32 %v514, %v621
    %v624 = vmul.f32 %v516, %v621
    %v625 = vmul.f32 %v585, %v621
    %v626 = vmul.f32 %v587, %v621
    %628 = vset.pattern.permute.xlu0 1
    %629 = vperm.xlu0 %628, %v617
    %v630 = vpop.permute.xlu0 %629
    %v632 = vadd.f32 %v623, %v630
    %v633 = vadd.f32 %v624, %v630
    %v634 = vadd.f32 %v625, %v630
    %v635 = vadd.f32 %v626, %v630
    %v636 = vmax.f32 %v632, 0.0
    %v637 = vmax.f32 %v633, 0.0
    %v638 = vmax.f32 %v634, 0.0
    %v639 = vmax.f32 %v635, 0.0
    %640 = vrot.lane.b32.xlu0 %v636, 17
    %v641 = vpop.permute.xlu0 %640
    %642 = vrot.lane.b32.xlu0 %v637, 17
    %v643 = vpop.permute.xlu0 %642
    %644 = vrot.lane.b32.xlu0 %v638, 17
    %v645 = vpop.permute.xlu0 %644
    %646 = vrot.lane.b32.xlu0 %v639, 17
    %v647 = vpop.permute.xlu0 %646
    %v648 = vsel %vm59, %v645, %v647
    %v649 = vsel %vm59, %v643, %v645
    %v650 = vsel %vm59, %v641, %v643
    %v651 = vsel %vm59, %v647, %v641
    %v652 = vld [vmem:[#allocation6] ss:$8 sm:$0xf]
    %v654 = vlaneseq
    %v655 = vshrl.u32 %v654, 7
    %v656 = vsub.s32 0, %v655
    %v657 = vrot.slane %v652, %v656
    %v658 = vlaneseq
    %v659 = vshrl.u32 %v658, 7
    %v660 = vsub.s32 1, %v659
    %v661 = vrot.slane %v652, %v660
    %v662 = vlaneseq
    %v663 = vshrl.u32 %v662, 7
    %v664 = vsub.s32 2, %v663
    %v665 = vrot.slane %v652, %v664
    %v666 = vlaneseq
    %v667 = vshrl.u32 %v666, 7
    %v668 = vsub.s32 3, %v667
    %v669 = vrot.slane %v652, %v668
    %v674 = vmul.f32 %v651, %v657
    %v675 = vmul.f32 %v650, %v661
    %v676 = vmul.f32 %v649, %v665
    %v677 = vmul.f32 %v648, %v669
    %678 = vst [vmem:[#allocation2] sm:$0xff] %v674
    %679 = vst [vmem:[#allocation2 + $0x8] sm:$0xff] %v675
    %680 = vst [vmem:[#allocation2 + $0x10] sm:$0xff] %v676
    %681 = vst [vmem:[#allocation2 + $0x18] sm:$0xff] %v677
    %682 = vrot.lane.b32.xlu0 %v636, 16
    %v683 = vpop.permute.xlu0 %682
    %684 = vrot.lane.b32.xlu0 %v637, 16
    %v685 = vpop.permute.xlu0 %684
    %686 = vrot.lane.b32.xlu0 %v638, 16
    %v687 = vpop.permute.xlu0 %686
    %688 = vrot.lane.b32.xlu0 %v639, 16
    %v689 = vpop.permute.xlu0 %688
    %v690 = vsel %vm102, %v687, %v689
    %v691 = vsel %vm102, %v685, %v687
    %v692 = vsel %vm102, %v683, %v685
    %v693 = vsel %vm102, %v689, %v683
    %v694 = vld [vmem:[%s107] ss:$8 sm:$0xf]
    %v696 = vlaneseq
    %v697 = vshrl.u32 %v696, 7
    %v698 = vsub.s32 0, %v697
    %v699 = vrot.slane %v694, %v698
    %v700 = vlaneseq
    %v701 = vshrl.u32 %v700, 7
    %v702 = vsub.s32 1, %v701
    %v703 = vrot.slane %v694, %v702
    %v704 = vlaneseq
    %v705 = vshrl.u32 %v704, 7
    %v706 = vsub.s32 2, %v705
    %v707 = vrot.slane %v694, %v706
    %v708 = vlaneseq
    %v709 = vshrl.u32 %v708, 7
    %v710 = vsub.s32 3, %v709
    %v711 = vrot.slane %v694, %v710
    %v716 = vmul.f32 %v693, %v699
    %v717 = vmul.f32 %v692, %v703
    %v718 = vmul.f32 %v691, %v707
    %v719 = vmul.f32 %v690, %v711
    %720 = vst [vmem:[#allocation2 + $0x20] sm:$0xff] %v716
    %721 = vst [vmem:[#allocation2 + $0x28] sm:$0xff] %v717
    %722 = vst [vmem:[#allocation2 + $0x30] sm:$0xff] %v718
    %723 = vst [vmem:[#allocation2 + $0x38] sm:$0xff] %v719
    %724 = vrot.lane.b32.xlu0 %v636, 15
    %v725 = vpop.permute.xlu0 %724
    %726 = vrot.lane.b32.xlu0 %v637, 15
    %v727 = vpop.permute.xlu0 %726
    %728 = vrot.lane.b32.xlu0 %v638, 15
    %v729 = vpop.permute.xlu0 %728
    %730 = vrot.lane.b32.xlu0 %v639, 15
    %v731 = vpop.permute.xlu0 %730
    %v732 = vsel %vm146, %v729, %v731
    %v733 = vsel %vm146, %v727, %v729
    %v734 = vsel %vm146, %v725, %v727
    %v735 = vsel %vm146, %v731, %v725
    %v736 = vld [vmem:[%s151] ss:$8 sm:$0xf]
    %v738 = vlaneseq
    %v739 = vshrl.u32 %v738, 7
    %v740 = vsub.s32 0, %v739
    %v741 = vrot.slane %v736, %v740
    %v742 = vlaneseq
    %v743 = vshrl.u32 %v742, 7
    %v744 = vsub.s32 1, %v743
    %v745 = vrot.slane %v736, %v744
    %v746 = vlaneseq
    %v747 = vshrl.u32 %v746, 7
    %v748 = vsub.s32 2, %v747
    %v749 = vrot.slane %v736, %v748
    %v750 = vlaneseq
    %v751 = vshrl.u32 %v750, 7
    %v752 = vsub.s32 3, %v751
    %v753 = vrot.slane %v736, %v752
    %v758 = vmul.f32 %v735, %v741
    %v759 = vmul.f32 %v734, %v745
    %v760 = vmul.f32 %v733, %v749
    %v761 = vmul.f32 %v732, %v753
    %762 = vst [vmem:[#allocation2 + $0x40] sm:$0xff] %v758
    %763 = vst [vmem:[#allocation2 + $0x48] sm:$0xff] %v759
    %764 = vst [vmem:[#allocation2 + $0x50] sm:$0xff] %v760
    %765 = vst [vmem:[#allocation2 + $0x58] sm:$0xff] %v761
    %766 = vrot.lane.b32.xlu0 %v636, 1
    %v767 = vpop.permute.xlu0 %766
    %768 = vrot.lane.b32.xlu0 %v637, 1
    %v769 = vpop.permute.xlu0 %768
    %770 = vrot.lane.b32.xlu0 %v638, 1
    %v771 = vpop.permute.xlu0 %770
    %772 = vrot.lane.b32.xlu0 %v639, 1
    %v773 = vpop.permute.xlu0 %772
    %v774 = vsel %vm190, %v771, %v773
    %v775 = vsel %vm190, %v769, %v771
    %v776 = vsel %vm190, %v767, %v769
    %v777 = vsel %vm190, %v773, %v767
    %v778 = vld [vmem:[%s195] ss:$8 sm:$0xf]
    %v780 = vlaneseq
    %v781 = vshrl.u32 %v780, 7
    %v782 = vsub.s32 0, %v781
    %v783 = vrot.slane %v778, %v782
    %v784 = vlaneseq
    %v785 = vshrl.u32 %v784, 7
    %v786 = vsub.s32 1, %v785
    %v787 = vrot.slane %v778, %v786
    %v788 = vlaneseq
    %v789 = vshrl.u32 %v788, 7
    %v790 = vsub.s32 2, %v789
    %v791 = vrot.slane %v778, %v790
    %v792 = vlaneseq
    %v793 = vshrl.u32 %v792, 7
    %v794 = vsub.s32 3, %v793
    %v795 = vrot.slane %v778, %v794
    %v800 = vmul.f32 %v777, %v783
    %v801 = vmul.f32 %v776, %v787
    %v802 = vmul.f32 %v775, %v791
    %v803 = vmul.f32 %v774, %v795
    %804 = vst [vmem:[#allocation2 + $0x60] sm:$0xff] %v800
    %805 = vst [vmem:[#allocation2 + $0x68] sm:$0xff] %v801
    %806 = vst [vmem:[#allocation2 + $0x70] sm:$0xff] %v802
    %807 = vst [vmem:[#allocation2 + $0x78] sm:$0xff] %v803
    %808 = vst [vmem:[#allocation2 + $0x80] sm:$0xff] %v636
    %809 = vst [vmem:[#allocation2 + $0x88] sm:$0xff] %v637
    %810 = vst [vmem:[#allocation2 + $0x90] sm:$0xff] %v638
    %811 = vst [vmem:[#allocation2 + $0x98] sm:$0xff] %v639
    %812 = vrot.lane.b32.xlu0 %v636, 127
    %v813 = vpop.permute.xlu0 %812
    %814 = vrot.lane.b32.xlu0 %v637, 127
    %v815 = vpop.permute.xlu0 %814
    %816 = vrot.lane.b32.xlu0 %v638, 127
    %v817 = vpop.permute.xlu0 %816
    %818 = vrot.lane.b32.xlu0 %v639, 127
    %v819 = vpop.permute.xlu0 %818
    %v820 = vsel %vm238, %v817, %v819
    %v821 = vsel %vm238, %v815, %v817
    %v822 = vsel %vm238, %v813, %v815
    %v823 = vsel %vm238, %v819, %v813
    %v824 = vld [vmem:[%s243] ss:$8 sm:$0xf]
    %v826 = vlaneseq
    %v827 = vshrl.u32 %v826, 7
    %v828 = vsub.s32 0, %v827
    %v829 = vrot.slane %v824, %v828
    %v830 = vlaneseq
    %v831 = vshrl.u32 %v830, 7
    %v832 = vsub.s32 1, %v831
    %v833 = vrot.slane %v824, %v832
    %v834 = vlaneseq
    %v835 = vshrl.u32 %v834, 7
    %v836 = vsub.s32 2, %v835
    %v837 = vrot.slane %v824, %v836
    %v838 = vlaneseq
    %v839 = vshrl.u32 %v838, 7
    %v840 = vsub.s32 3, %v839
    %v841 = vrot.slane %v824, %v840
    %v846 = vmul.f32 %v822, %v829
    %v847 = vmul.f32 %v821, %v833
    %v848 = vmul.f32 %v820, %v837
    %v849 = vmul.f32 %v823, %v841
    %850 = vst [vmem:[#allocation2 + $0xa0] sm:$0xff] %v846
    %851 = vst [vmem:[#allocation2 + $0xa8] sm:$0xff] %v847
    %852 = vst [vmem:[#allocation2 + $0xb0] sm:$0xff] %v848
    %853 = vst [vmem:[#allocation2 + $0xb8] sm:$0xff] %v849
    %854 = vrot.lane.b32.xlu0 %v636, 113
    %v855 = vpop.permute.xlu0 %854
    %856 = vrot.lane.b32.xlu0 %v637, 113
    %v857 = vpop.permute.xlu0 %856
    %858 = vrot.lane.b32.xlu0 %v638, 113
    %v859 = vpop.permute.xlu0 %858
    %860 = vrot.lane.b32.xlu0 %v639, 113
    %v861 = vpop.permute.xlu0 %860
    %v862 = vsel %vm282, %v859, %v861
    %v863 = vsel %vm282, %v857, %v859
    %v864 = vsel %vm282, %v855, %v857
    %v865 = vsel %vm282, %v861, %v855
    %v866 = vld [vmem:[%s287] ss:$8 sm:$0xf]
    %v868 = vlaneseq
    %v869 = vshrl.u32 %v868, 7
    %v870 = vsub.s32 0, %v869
    %v871 = vrot.slane %v866, %v870
    %v872 = vlaneseq
    %v873 = vshrl.u32 %v872, 7
    %v874 = vsub.s32 1, %v873
    %v875 = vrot.slane %v866, %v874
    %v876 = vlaneseq
    %v877 = vshrl.u32 %v876, 7
    %v878 = vsub.s32 2, %v877
    %v879 = vrot.slane %v866, %v878
    %v880 = vlaneseq
    %v881 = vshrl.u32 %v880, 7
    %v882 = vsub.s32 3, %v881
    %v883 = vrot.slane %v866, %v882
    %v888 = vmul.f32 %v864, %v871
    %v889 = vmul.f32 %v863, %v875
    %v890 = vmul.f32 %v862, %v879
    %v891 = vmul.f32 %v865, %v883
    %892 = vst [vmem:[#allocation2 + $0xc0] sm:$0xff] %v888
    %893 = vst [vmem:[#allocation2 + $0xc8] sm:$0xff] %v889
    %894 = vst [vmem:[#allocation2 + $0xd0] sm:$0xff] %v890
    %895 = vst [vmem:[#allocation2 + $0xd8] sm:$0xff] %v891
    %896 = vrot.lane.b32.xlu0 %v636, 112
    %v897 = vpop.permute.xlu0 %896
    %898 = vrot.lane.b32.xlu0 %v637, 112
    %v899 = vpop.permute.xlu0 %898
    %900 = vrot.lane.b32.xlu0 %v638, 112
    %v901 = vpop.permute.xlu0 %900
    %902 = vrot.lane.b32.xlu0 %v639, 112
    %v903 = vpop.permute.xlu0 %902
    %v904 = vsel %vm326, %v901, %v903
    %v905 = vsel %vm326, %v899, %v901
    %v906 = vsel %vm326, %v897, %v899
    %v907 = vsel %vm326, %v903, %v897
    %v908 = vld [vmem:[%s331] ss:$8 sm:$0xf]
    %v910 = vlaneseq
    %v911 = vshrl.u32 %v910, 7
    %v912 = vsub.s32 0, %v911
    %v913 = vrot.slane %v908, %v912
    %v914 = vlaneseq
    %v915 = vshrl.u32 %v914, 7
    %v916 = vsub.s32 1, %v915
    %v917 = vrot.slane %v908, %v916
    %v918 = vlaneseq
    %v919 = vshrl.u32 %v918, 7
    %v920 = vsub.s32 2, %v919
    %v921 = vrot.slane %v908, %v920
    %v922 = vlaneseq
    %v923 = vshrl.u32 %v922, 7
    %v924 = vsub.s32 3, %v923
    %v925 = vrot.slane %v908, %v924
    %v930 = vmul.f32 %v906, %v913
    %v931 = vmul.f32 %v905, %v917
    %v932 = vmul.f32 %v904, %v921
    %v933 = vmul.f32 %v907, %v925
    %934 = vst [vmem:[#allocation2 + $0xe0] sm:$0xff] %v930
    %935 = vst [vmem:[#allocation2 + $0xe8] sm:$0xff] %v931
    %936 = vst [vmem:[#allocation2 + $0xf0] sm:$0xff] %v932
    %937 = vst [vmem:[#allocation2 + $0xf8] sm:$0xff] %v933
    %938 = vrot.lane.b32.xlu0 %v636, 111
    %v939 = vpop.permute.xlu0 %938
    %940 = vrot.lane.b32.xlu0 %v637, 111
    %v941 = vpop.permute.xlu0 %940
    %942 = vrot.lane.b32.xlu0 %v638, 111
    %v943 = vpop.permute.xlu0 %942
    %944 = vrot.lane.b32.xlu0 %v639, 111
    %v945 = vpop.permute.xlu0 %944
    %v946 = vsel %vm370, %v943, %v945
    %v947 = vsel %vm370, %v941, %v943
    %v948 = vsel %vm370, %v939, %v941
    %v949 = vsel %vm370, %v945, %v939
    %v950 = vld [vmem:[%s375] ss:$8 sm:$0xf]
    %v952 = vlaneseq
    %v953 = vshrl.u32 %v952, 7
    %v954 = vsub.s32 0, %v953
    %v955 = vrot.slane %v950, %v954
    %v956 = vlaneseq
    %v957 = vshrl.u32 %v956, 7
    %v958 = vsub.s32 1, %v957
    %v959 = vrot.slane %v950, %v958
    %v960 = vlaneseq
    %v961 = vshrl.u32 %v960, 7
    %v962 = vsub.s32 2, %v961
    %v963 = vrot.slane %v950, %v962
    %v964 = vlaneseq
    %v965 = vshrl.u32 %v964, 7
    %v966 = vsub.s32 3, %v965
    %v967 = vrot.slane %v950, %v966
    %v972 = vmul.f32 %v948, %v955
    %v973 = vmul.f32 %v947, %v959
    %v974 = vmul.f32 %v946, %v963
    %v975 = vmul.f32 %v949, %v967
    %976 = vst [vmem:[#allocation2 + $0x100] sm:$0xff] %v972
    %977 = vst [vmem:[#allocation2 + $0x108] sm:$0xff] %v973
    %978 = vst [vmem:[#allocation2 + $0x110] sm:$0xff] %v974
    %979 = vst [vmem:[#allocation2 + $0x118] sm:$0xff] %v975
    %v980 = vld [vmem:[%s2] sm:$0xff]
    %v981 = vld [vmem:[#allocation2] sm:$0xff]
    %v982 = vld [vmem:[#allocation2 + $0x8] sm:$0xff]
    %v983 = vld [vmem:[#allocation2 + $0x10] sm:$0xff]
    %v984 = vld [vmem:[#allocation2 + $0x18] sm:$0xff]
    %v985 = vld [vmem:[#allocation2 + $0x20] sm:$0xff]
    %v986 = vld [vmem:[#allocation2 + $0x28] sm:$0xff]
    %v987 = vld [vmem:[#allocation2 + $0x30] sm:$0xff]
    %v988 = vld [vmem:[#allocation2 + $0x38] sm:$0xff]
    %v989 = vld [vmem:[#allocation2 + $0x40] sm:$0xff]
    %v990 = vld [vmem:[#allocation2 + $0x48] sm:$0xff]
    %v991 = vld [vmem:[#allocation2 + $0x50] sm:$0xff]
    %v992 = vld [vmem:[#allocation2 + $0x58] sm:$0xff]
    %v993 = vld [vmem:[#allocation2 + $0x60] sm:$0xff]
    %v994 = vld [vmem:[#allocation2 + $0x68] sm:$0xff]
    %v995 = vld [vmem:[#allocation2 + $0x70] sm:$0xff]
    %v996 = vld [vmem:[#allocation2 + $0x78] sm:$0xff]
    %v997 = vld [vmem:[#allocation2 + $0x80] sm:$0xff]
    %v998 = vld [vmem:[#allocation2 + $0x88] sm:$0xff]
    %v999 = vld [vmem:[#allocation2 + $0x90] sm:$0xff]
    %v1000 = vld [vmem:[#allocation2 + $0x98] sm:$0xff]
    %v1001 = vld [vmem:[#allocation2 + $0xa0] sm:$0xff]
    %v1002 = vld [vmem:[#allocation2 + $0xa8] sm:$0xff]
    %v1003 = vld [vmem:[#allocation2 + $0xb0] sm:$0xff]
    %v1004 = vld [vmem:[#allocation2 + $0xb8] sm:$0xff]
    %v1005 = vld [vmem:[#allocation2 + $0xc0] sm:$0xff]
    %v1006 = vld [vmem:[#allocation2 + $0xc8] sm:$0xff]
    %v1007 = vld [vmem:[#allocation2 + $0xd0] sm:$0xff]
    %v1008 = vld [vmem:[#allocation2 + $0xd8] sm:$0xff]
    %v1009 = vld [vmem:[#allocation2 + $0xe0] sm:$0xff]
    %v1010 = vld [vmem:[#allocation2 + $0xe8] sm:$0xff]
    %v1011 = vld [vmem:[#allocation2 + $0xf0] sm:$0xff]
    %v1012 = vld [vmem:[#allocation2 + $0xf8] sm:$0xff]
    %v1013 = vld [vmem:[#allocation2 + $0x100] sm:$0xff]
    %v1014 = vld [vmem:[#allocation2 + $0x108] sm:$0xff]
    %v1015 = vld [vmem:[#allocation2 + $0x110] sm:$0xff]
    %v1016 = vld [vmem:[#allocation2 + $0x118] sm:$0xff]
    %v1018 = vsel %vm443, %v980, 0
    %1020 = vmatprep.subr.mxu0 %v982
    %1021 = vmatpush1.msra.mxu0 %v981
    %1022 = vmatprep.subr.mxu0 %v986
    %1023 = vmatpush1.msra.mxu0 %v985
    %1024 = vmatprep.subr.mxu0 %v990
    %1025 = vmatpush1.msra.mxu0 %v989
    %1026 = vmatprep.subr.mxu0 %v994
    %1027 = vmatpush1.msra.mxu0 %v993
    %1028 = vmatprep.subr.mxu0 %v998
    %1029 = vmatpush1.msra.mxu0 %v997
    %1030 = vmatprep.subr.mxu0 %v1002
    %1031 = vmatpush1.msra.mxu0 %v1001
    %1032 = vmatprep.subr.mxu0 %v1006
    %1033 = vmatpush1.msra.mxu0 %v1005
    %1034 = vmatprep.subr.mxu0 %v1010
    %1035 = vmatpush1.msra.mxu0 %v1009
    %1036 = vmatprep.subr.mxu0 %v1014
    %1037 = vmatpush1.msra.mxu0 %v1013
    %1038 = vmatprep.subr.mxu0 0.0
    %1039 = vmatpush1.msra.mxu0 0.0
    %1040 = vmatprep.subr.mxu0 0.0
    %1041 = vmatpush1.msra.mxu0 0.0
    %1042 = vmatprep.subr.mxu0 0.0
    %1043 = vmatpush1.msra.mxu0 0.0
    %1044 = vmatprep.subr.mxu0 0.0
    %1045 = vmatpush1.msra.mxu0 0.0
    %1046 = vmatprep.subr.mxu0 0.0
    %1047 = vmatpush1.msra.mxu0 0.0
    %1048 = vmatprep.subr.mxu0 0.0
    %1049 = vmatpush1.msra.mxu0 0.0
    %1050 = vmatprep.subr.mxu0 0.0
    %1051 = vmatpush1.msra.mxu0 0.0
    %1052 = vmatprep.subr.mxu0 0.0
    %1053 = vmatpush1.msra.mxu0 0.0
    %1054 = vmatprep.subr.mxu0 0.0
    %1055 = vmatpush1.msra.mxu0 0.0
    %1056 = vmatprep.subr.mxu0 0.0
    %1057 = vmatpush1.msra.mxu0 0.0
    %1058 = vmatprep.subr.mxu0 0.0
    %1059 = vmatpush1.msra.mxu0 0.0
    %1060 = vmatprep.subr.mxu0 0.0
    %1061 = vmatpush1.msra.mxu0 0.0
    %1062 = vmatprep.subr.mxu0 0.0
    %1063 = vmatpush1.msra.mxu0 0.0
    %1064 = vmatprep.subr.mxu0 0.0
    %1065 = vmatpush1.msra.mxu0 0.0
    %1066 = vmatprep.subr.mxu0 0.0
    %1067 = vmatpush1.msra.mxu0 0.0
    %1068 = vmatprep.subr.mxu0 0.0
    %1069 = vmatpush1.msra.mxu0 0.0
    %1070 = vmatprep.subr.mxu0 0.0
    %1071 = vmatpush1.msra.mxu0 0.0
    %1072 = vmatprep.subr.mxu0 0.0
    %1073 = vmatpush1.msra.mxu0 0.0
    %1074 = vmatprep.subr.mxu0 0.0
    %1075 = vmatpush1.msra.mxu0 0.0
    %1076 = vmatprep.subr.mxu0 0.0
    %1077 = vmatpush1.msra.mxu0 0.0
    %1078 = vmatprep.subr.mxu0 0.0
    %1079 = vmatpush1.msra.mxu0 0.0
    %1080 = vmatprep.subr.mxu0 0.0
    %1081 = vmatpush1.msra.mxu0 0.0
    %1082 = vmatprep.subr.mxu0 0.0
    %1083 = vmatpush1.msra.mxu0 0.0
    %1084 = vmatprep.mubr.f32.mxu0 0.0
    %1085 = vmatmul.mubr.f32.gmra.mrb[0].mxu0 %v1018
    %v1086 = vpop.f32.mrb[0].mxu0
    %v1087 = vadd.f32 0.0, %v1086
    %v1088 = vpop.f32.mrb[0].mxu0
    %v1089 = vadd.f32 0.0, %v1088
    %1090 = vdwg.mxu0
    %1091 = vmatprep.subr.mxu0 %v984
    %1092 = vmatpush1.msra.mxu0 %v983
    %1093 = vmatprep.subr.mxu0 %v988
    %1094 = vmatpush1.msra.mxu0 %v987
    %1095 = vmatprep.subr.mxu0 %v992
    %1096 = vmatpush1.msra.mxu0 %v991
    %1097 = vmatprep.subr.mxu0 %v996
    %1098 = vmatpush1.msra.mxu0 %v995
    %1099 = vmatprep.subr.mxu0 %v1000
    %1100 = vmatpush1.msra.mxu0 %v999
    %1101 = vmatprep.subr.mxu0 %v1004
    %1102 = vmatpush1.msra.mxu0 %v1003
    %1103 = vmatprep.subr.mxu0 %v1008
    %1104 = vmatpush1.msra.mxu0 %v1007
    %1105 = vmatprep.subr.mxu0 %v1012
    %1106 = vmatpush1.msra.mxu0 %v1011
    %1107 = vmatprep.subr.mxu0 %v1016
    %1108 = vmatpush1.msra.mxu0 %v1015
    %1109 = vmatprep.subr.mxu0 0.0
    %1110 = vmatpush1.msra.mxu0 0.0
    %1111 = vmatprep.subr.mxu0 0.0
    %1112 = vmatpush1.msra.mxu0 0.0
    %1113 = vmatprep.subr.mxu0 0.0
    %1114 = vmatpush1.msra.mxu0 0.0
    %1115 = vmatprep.subr.mxu0 0.0
    %1116 = vmatpush1.msra.mxu0 0.0
    %1117 = vmatprep.subr.mxu0 0.0
    %1118 = vmatpush1.msra.mxu0 0.0
    %1119 = vmatprep.subr.mxu0 0.0
    %1120 = vmatpush1.msra.mxu0 0.0
    %1121 = vmatprep.subr.mxu0 0.0
    %1122 = vmatpush1.msra.mxu0 0.0
    %1123 = vmatprep.subr.mxu0 0.0
    %1124 = vmatpush1.msra.mxu0 0.0
    %1125 = vmatprep.subr.mxu0 0.0
    %1126 = vmatpush1.msra.mxu0 0.0
    %1127 = vmatprep.subr.mxu0 0.0
    %1128 = vmatpush1.msra.mxu0 0.0
    %1129 = vmatprep.subr.mxu0 0.0
    %1130 = vmatpush1.msra.mxu0 0.0
    %1131 = vmatprep.subr.mxu0 0.0
    %1132 = vmatpush1.msra.mxu0 0.0
    %1133 = vmatprep.subr.mxu0 0.0
    %1134 = vmatpush1.msra.mxu0 0.0
    %1135 = vmatprep.subr.mxu0 0.0
    %1136 = vmatpush1.msra.mxu0 0.0
    %1137 = vmatprep.subr.mxu0 0.0
    %1138 = vmatpush1.msra.mxu0 0.0
    %1139 = vmatprep.subr.mxu0 0.0
    %1140 = vmatpush1.msra.mxu0 0.0
    %1141 = vmatprep.subr.mxu0 0.0
    %1142 = vmatpush1.msra.mxu0 0.0
    %1143 = vmatprep.subr.mxu0 0.0
    %1144 = vmatpush1.msra.mxu0 0.0
    %1145 = vmatprep.subr.mxu0 0.0
    %1146 = vmatpush1.msra.mxu0 0.0
    %1147 = vmatprep.subr.mxu0 0.0
    %1148 = vmatpush1.msra.mxu0 0.0
    %1149 = vmatprep.subr.mxu0 0.0
    %1150 = vmatpush1.msra.mxu0 0.0
    %1151 = vmatprep.subr.mxu0 0.0
    %1152 = vmatpush1.msra.mxu0 0.0
    %1153 = vmatprep.subr.mxu0 0.0
    %1154 = vmatpush1.msra.mxu0 0.0
    %1155 = vmatprep.mubr.f32.mxu0 0.0
    %1156 = vmatmul.mubr.f32.gmra.mrb[0].mxu0 %v1018
    %v1157 = vpop.f32.mrb[0].mxu0
    %v1158 = vadd.f32 0.0, %v1157
    %v1159 = vpop.f32.mrb[0].mxu0
    %v1160 = vadd.f32 0.0, %v1159
    %1161 = vdwg.mxu0
    %v1162 = vadd.f32 %v1087, %v1089
    %v1163 = vadd.f32 %v1162, %v1158
    %v1164 = vadd.f32 %v1163, %v1160
    %1165 = vadd.xlane.f32.xlu0 %v1164
    %v1166 = vpop.xlane.xlu0 %1165
    %v1167 = vmul.f32 %v1166, 0.001953125
    %v1168 = vmul.f32 %v1087, %v1087
    %v1169 = vmul.f32 %v1089, %v1089
    %v1170 = vmul.f32 %v1158, %v1158
    %v1171 = vmul.f32 %v1160, %v1160
    %v1172 = vadd.f32 %v1168, %v1169
    %v1173 = vadd.f32 %v1172, %v1170
    %v1174 = vadd.f32 %v1173, %v1171
    %1175 = vadd.xlane.f32.xlu0 %v1174
    %v1176 = vpop.xlane.xlu0 %1175
    %v1177 = vmul.f32 %v1176, 0.001953125
    %v1178 = vmul.f32 %v1167, %v1167
    %v1179 = vsub.f32 %v1177, %v1178
    %v1180 = vmax.f32 %v1179, 0.0
    %v1181 = vld [vmem:[%s3] sm:$0xff]
    %v1182 = vadd.f32 %v1180, 1e-05
    %v1183 = vrsqrt.pop %v1182
    %v1184 = vmul.f32 %v1181, %v1183
    %v1185 = vmul.f32 %v1167, %v1184
    %1187 = vrot.lane.b32.xlu0 %v1185, 1
    %v1188 = vpop.permute.xlu0 %1187
    %v1190 = vsub.f32 %v1181, %v1188
    %1192 = vset.pattern.permute.xlu0 2
    %1193 = vperm.xlu0 %1192, %v1184
    %v1194 = vpop.permute.xlu0 %1193
    %v1196 = vmul.f32 %v1087, %v1194
    %v1197 = vmul.f32 %v1089, %v1194
    %v1198 = vmul.f32 %v1158, %v1194
    %v1199 = vmul.f32 %v1160, %v1194
    %1201 = vset.pattern.permute.xlu0 3
    %1202 = vperm.xlu0 %1201, %v1190
    %v1203 = vpop.permute.xlu0 %1202
    %v1205 = vadd.f32 %v1196, %v1203
    %v1206 = vadd.f32 %v1197, %v1203
    %v1207 = vadd.f32 %v1198, %v1203
    %v1208 = vadd.f32 %v1199, %v1203
    %v1209 = vadd.f32 %v1205, %v45
    %v1210 = vadd.f32 %v1206, %v46
    %v1211 = vadd.f32 %v1207, %v47
    %v1212 = vadd.f32 %v1208, %v48
    %v1213 = vmax.f32 %v1209, 0.0
    %v1214 = vmax.f32 %v1210, 0.0
    %v1215 = vmax.f32 %v1211, 0.0
    %v1216 = vmax.f32 %v1212, 0.0
    %1217 = vst [vmem:[#allocation8] sm:$0xff] %v1213
    %1218 = vst [vmem:[#allocation8 + $0x8] sm:$0xff] %v1214
    %1219 = vst [vmem:[#allocation8 + $0x10] sm:$0xff] %v1215
    %1220 = vst [vmem:[#allocation8 + $0x18] sm:$0xff] %v1216
    // Predicated region
    $region30: #{tpu_custom_call.1} parent=1 // pred_check
      _
    $region31: #{tpu_custom_call.1} parent=1 // pred_check_branch
      %1222 = sbr.rel (0) target = $region33
    $region32: #{tpu_custom_call.1} parent=1 // pred_region
      %s1224 = ssub.s32 512, 512
      %1225 = vsyncadd [#allocation5], %s1224
      %s1227 = sshll.u32 [#allocation8], 4
      %s1228 = int_to_ptr.vmem [resolvable:$true] %s1227
      %1230 = dma.vmem_to_hbm [thread:$0]  %s1228, 512, %s5, [#allocation5]
    $region33: #{tpu_custom_call.1} parent=1 // pred_fallthru
      _
    // Predicated region
    $region34: #{tpu_custom_call.1} parent=1 // pred_check
      _
    $region35: #{tpu_custom_call.1} parent=1 // pred_check_branch
      %1232 = sbr.rel (0) target = $region37
    $region36: #{tpu_custom_call.1} parent=1 // pred_region
      %1233 = dma.done [#allocation5], 512
    $region37: #{tpu_custom_call.1} parent=1 // pred_fallthru
      _
    %1234 = vsyncpa [#allocation4], 1
    %1235 = vsyncpa [#allocation7], 1
    %1236 = vsyncpa [#allocation5], 1

</llo_original>
